<compile_context>
chip_gen: v6e
topology: v6e:2x2x1
jax: 0.10.0
libtpu: 0.0.40
codegen_flags: <defaults>
</compile_context>

<pallas_src>
import functools
import math

import jax
import jax.numpy as jnp
from jax.experimental import pallas as pl
from jax.experimental.pallas import tpu as pltpu


def _round_up(x, m):
    return (x + m - 1) // m * m


# ---------------------------------------------------------------------------
# Fused GroupNorm + SiLU + 3x3 conv kernel (one image per grid step)
# ---------------------------------------------------------------------------

def _gn_silu_conv3x3_kernel(x_ref, gamma_ref, beta_ref, grp_ref, w_ref, b_ref,
                            o_ref, *, groups, eps):
    _, H, W, C = x_ref.shape
    coutp = w_ref.shape[-1]
    hw = H * W

    x = x_ref[0].reshape(hw, C)                               # (HW, C) f32

    # ---- GroupNorm statistics: numerically stable two-pass mean / variance ----
    cnt = jnp.float32(hw * (C // groups))                     # elements per group
    grp = grp_ref[...]                                        # (C, C) same-group 0/1
    s1 = jnp.sum(x, axis=0, keepdims=True)                    # (1, C) per-channel sum
    mean_c = jnp.dot(s1, grp, preferred_element_type=jnp.float32) / cnt   # (1, C)
    diff = x - mean_c                                          # (HW, C)
    s2 = jnp.sum(diff * diff, axis=0, keepdims=True)           # (1, C)
    var_c = jnp.dot(s2, grp, preferred_element_type=jnp.float32) / cnt    # (1, C)
    rstd_c = jax.lax.rsqrt(var_c + eps)                        # (1, C)

    # ---- GroupNorm affine + SiLU (f32 VPU / EUP) ----
    a = diff * (rstd_c * gamma_ref[...]) + beta_ref[...]       # (HW, C)
    act = a * jax.nn.sigmoid(a)

    # ---- 3x3 conv, padding=1: fold the 9 taps into one large-K matmul ----
    act3 = act.reshape(H, W, C)
    zrow = jnp.zeros((1, W, C), jnp.float32)
    zcol = jnp.zeros((H + 2, 1, C), jnp.float32)
    padded = jnp.concatenate([zrow, act3, zrow], axis=0)       # (H+2, W,   C)
    padded = jnp.concatenate([zcol, padded, zcol], axis=1)     # (H+2, W+2, C)
    taps = [padded[kh:kh + H, kw:kw + W, :].reshape(hw, C)
            for kh in range(3) for kw in range(3)]
    lhs = jnp.concatenate(taps, axis=-1).astype(jnp.bfloat16)  # (HW, 9*C) bf16

    out = jnp.dot(lhs, w_ref[...], preferred_element_type=jnp.float32)    # (HW, Coutp)
    out = out + b_ref[...]
    o_ref[0] = out.reshape(H, W, coutp).astype(o_ref.dtype)


def gn_silu_conv_pallas(x, gamma2, beta2, grp, w_mat, bias_p, *, groups, eps):
    """x: (N,H,W,C) f32 -> (N,H,W,Coutp) bf16 (fused GroupNorm+SiLU+3x3 conv)."""
    N, H, W, C = x.shape
    coutp = w_mat.shape[-1]

    # Per-step VMEM budget: double-buffered in/out blocks + resident weights +
    # in-kernel temporaries (activated slab, padded slab, (HW, 9C) lhs, ...).
    in_bytes = H * W * C * 4
    out_bytes = H * W * coutp * 2
    est = 2 * (in_bytes + out_bytes) + w_mat.size * 2 + 12 * in_bytes + (1 << 20)
    vmem_limit = int(min(max(est, 32 << 20), 64 << 20))

    kernel = functools.partial(_gn_silu_conv3x3_kernel, groups=groups, eps=eps)
    return pl.pallas_call(
        kernel,
        out_shape=jax.ShapeDtypeStruct((N, H, W, coutp), jnp.bfloat16),
        grid=(N,),
        in_specs=[
            pl.BlockSpec((1, H, W, C), lambda n: (n, 0, 0, 0)),      # image slab
            pl.BlockSpec((1, C), lambda n: (0, 0)),                  # gamma
            pl.BlockSpec((1, C), lambda n: (0, 0)),                  # beta
            pl.BlockSpec((C, C), lambda n: (0, 0)),                  # group indicator
            pl.BlockSpec((9 * C, coutp), lambda n: (0, 0)),          # conv weight
            pl.BlockSpec((1, coutp), lambda n: (0, 0)),              # bias
        ],
        out_specs=pl.BlockSpec((1, H, W, coutp), lambda n: (n, 0, 0, 0)),
        compiler_params=pltpu.CompilerParams(
            dimension_semantics=("parallel",),
            vmem_limit_bytes=vmem_limit),
    )(x, gamma2, beta2, grp, w_mat, bias_p)


# ---------------------------------------------------------------------------
# Parameter init / one-time prep
# ---------------------------------------------------------------------------

def init_unet_output_layer(key, in_channels, out_channels):
    k1, k2, k3, k4 = jax.random.split(key, 4)
    bound = 1.0 / math.sqrt(in_channels * 9)
    return {
        "gamma": 1.0 + 0.1 * jax.random.normal(k3, (in_channels,), jnp.float32),
        "beta": 0.1 * jax.random.normal(k4, (in_channels,), jnp.float32),
        "w": jax.random.uniform(k1, (out_channels, in_channels, 3, 3),
                                jnp.float32, -bound, bound),
        "b": jax.random.uniform(k2, (out_channels,), jnp.float32, -bound, bound),
    }


def prepare_params(p, groups=32):
    """One-time prep (outside the hot path):
      * conv weight (Cout,Cin,3,3) -> (9*Cin, Coutp) bf16, Cout zero-padded to a
        lane-dense multiple of 128, tap order (kh, kw, cin) matching the kernel lhs.
      * bias -> (1, Coutp) f32; gamma/beta -> (1, Cin) f32.
      * (Cin, Cin) same-group indicator for in-kernel group reduce/broadcast.
    """
    cout, cin = p["w"].shape[0], p["w"].shape[1]
    coutp = _round_up(cout, 128)
    w = jnp.transpose(p["w"], (2, 3, 1, 0))                        # (3,3,Cin,Cout)
    w = jnp.pad(w, ((0, 0), (0, 0), (0, 0), (0, coutp - cout)))
    w_mat = w.reshape(9 * cin, coutp).astype(jnp.bfloat16)
    bias_p = jnp.pad(p["b"], (0, coutp - cout)).reshape(1, coutp).astype(jnp.float32)
    gid = jnp.arange(cin) // (cin // groups)
    grp = (gid[:, None] == gid[None, :]).astype(jnp.float32)       # (Cin, Cin)
    return {
        "gamma": p["gamma"].reshape(1, cin).astype(jnp.float32),
        "beta": p["beta"].reshape(1, cin).astype(jnp.float32),
        "grp": grp, "w_mat": w_mat, "b": bias_p, "out_channels": cout,
    }


# ---------------------------------------------------------------------------
# Forward pass
# ---------------------------------------------------------------------------

@functools.partial(jax.jit, static_argnames=("out_channels", "groups", "eps"))
def unet_output_layer_fwd(x_nchw, gamma2, beta2, grp, w_mat, bias_p,
                          out_channels, groups=32, eps=1e-5):
    x = jnp.transpose(x_nchw, (0, 2, 3, 1))                        # NCHW -> NHWC
    y = gn_silu_conv_pallas(x, gamma2, beta2, grp, w_mat, bias_p,
                            groups=groups, eps=eps)                # (N,H,W,Coutp) bf16
    y = y[..., :out_channels].astype(jnp.float32)                  # tiny slice + cast
    return jnp.transpose(y, (0, 3, 1, 2))                          # NHWC -> NCHW


# ---------------------------------------------------------------------------
# Pure-JAX reference (correctness check only)
# ---------------------------------------------------------------------------

def reference_fwd(x_nchw, gamma, beta, w, b, groups=32, eps=1e-5):
    N, C, H, W = x_nchw.shape
    xg = x_nchw.reshape(N, groups, C // groups, H, W)
    mean = xg.mean(axis=(2, 3, 4), keepdims=True)
    var = xg.var(axis=(2, 3, 4), keepdims=True)
    xn = ((xg - mean) / jnp.sqrt(var + eps)).reshape(N, C, H, W)
    xn = xn * gamma[None, :, None, None] + beta[None, :, None, None]
    a = xn * jax.nn.sigmoid(xn)
    y = jax.lax.conv_general_dilated(
        a, w, window_strides=(1, 1), padding=((1, 1), (1, 1)),
        dimension_numbers=("NCHW", "OIHW", "NCHW"))
    return y + b[None, :, None, None]


# ---------------------------------------------------------------------------
# Main
# ---------------------------------------------------------------------------

if __name__ == "__main__":
    key = jax.random.PRNGKey(0)
    kx, kp = jax.random.split(key)

    N, Cin, Cout, H, W = 2, 64, 4, 16, 16
    x = jax.random.normal(kx, (N, Cin, H, W), jnp.float32)    # NCHW like torch

    params = init_unet_output_layer(kp, Cin, Cout)
    prepped = prepare_params(params)

    out = unet_output_layer_fwd(
        x, prepped["gamma"], prepped["beta"], prepped["grp"],
        prepped["w_mat"], prepped["b"], out_channels=prepped["out_channels"])
    out = jax.block_until_ready(out)

    assert out.shape == (N, Cout, H, W), out.shape
    assert bool(jnp.all(jnp.isfinite(out)))

    ref = reference_fwd(x, params["gamma"], params["beta"],
                        params["w"], params["b"])
    err = float(jnp.max(jnp.abs(out - ref)))
    # bf16 MXU operands + bf16 output storage (intentional); f32 accumulation.
    assert err < 5e-2, f"max abs err {err}"

    print("KERNEL_OK")
</pallas_src>

<mosaic_0001>
module attributes {stable_mosaic.version = 11 : i64} {
  func.func @_gn_silu_conv3x3_kernel(%arg0: i32, %arg1: memref<1x16x16x64xf32, #tpu.memory_space<vmem>>, %arg2: memref<1x64xf32, #tpu.memory_space<vmem>>, %arg3: memref<1x64xf32, #tpu.memory_space<vmem>>, %arg4: memref<64x64xf32, #tpu.memory_space<vmem>>, %arg5: memref<576x128xbf16, #tpu.memory_space<vmem>>, %arg6: memref<1x128xf32, #tpu.memory_space<vmem>>, %arg7: memref<1x16x16x128xbf16, #tpu.memory_space<vmem>>) attributes {dimension_semantics = [#tpu.dimension_semantics<parallel>], iteration_bounds = array<i64: 2>, scalar_prefetch = 0 : i64, scratch_operands = 0 : i64, tpu.core_type = #tpu.core_type<tc>, window_params = [{transform_indices = @transform_0, window_bounds = array<i64: 1, 16, 16, 64>}, {pipeline_mode = #tpu.pipeline_mode<synchronous>, transform_indices = @transform_1, window_bounds = array<i64: 1, 64>}, {pipeline_mode = #tpu.pipeline_mode<synchronous>, transform_indices = @transform_2, window_bounds = array<i64: 1, 64>}, {pipeline_mode = #tpu.pipeline_mode<synchronous>, transform_indices = @transform_3, window_bounds = array<i64: 64, 64>}, {pipeline_mode = #tpu.pipeline_mode<synchronous>, transform_indices = @transform_4, window_bounds = array<i64: 576, 128>}, {pipeline_mode = #tpu.pipeline_mode<synchronous>, transform_indices = @transform_5, window_bounds = array<i64: 1, 128>}, {transform_indices = @transform_6, window_bounds = array<i64: 1, 16, 16, 128>}]} {
    %c0 = arith.constant 0 : index
    %c0_0 = arith.constant 0 : index
    %c0_1 = arith.constant 0 : index
    %c0_2 = arith.constant 0 : index
    %0 = vector.load %arg1[%c0, %c0_0, %c0_1, %c0_2] : memref<1x16x16x64xf32, #tpu.memory_space<vmem>>, vector<1x16x16x64xf32>
    %1 = vector.shape_cast %0 : vector<1x16x16x64xf32> to vector<16x16x64xf32>
    %2 = vector.shape_cast %1 : vector<16x16x64xf32> to vector<256x64xf32>
    %c0_3 = arith.constant 0 : index
    %c0_4 = arith.constant 0 : index
    %3 = vector.load %arg4[%c0_3, %c0_4] : memref<64x64xf32, #tpu.memory_space<vmem>>, vector<64x64xf32>
    %cst = arith.constant dense<0.000000e+00> : vector<64xf32>
    %4 = vector.multi_reduction <add>, %2, %cst [0] : vector<256x64xf32> to vector<64xf32>
    %5 = vector.shape_cast %4 : vector<64xf32> to vector<1x64xf32>
    %cst_5 = arith.constant dense<0.000000e+00> : vector<1x64xf32>
    %6 = tpu.matmul %5, %3, %cst_5 {dimension_numbers = #tpu.dot_dimension_numbers<[1], [0], [0], [1], [0, 0, 1, 1], [], []>} : vector<1x64xf32>, vector<64x64xf32>, vector<1x64xf32> -> vector<1x64xf32>
    %cst_6 = arith.constant 5.120000e+02 : f32
    %7 = vector.broadcast %cst_6 : f32 to vector<1x64xf32>
    %8 = arith.divf %6, %7 : vector<1x64xf32>
    %9 = vector.broadcast %8 : vector<1x64xf32> to vector<256x64xf32>
    %10 = arith.subf %2, %9 : vector<256x64xf32>
    %11 = arith.mulf %10, %10 : vector<256x64xf32>
    %cst_7 = arith.constant dense<0.000000e+00> : vector<64xf32>
    %12 = vector.multi_reduction <add>, %11, %cst_7 [0] : vector<256x64xf32> to vector<64xf32>
    %13 = vector.shape_cast %12 : vector<64xf32> to vector<1x64xf32>
    %cst_8 = arith.constant dense<0.000000e+00> : vector<1x64xf32>
    %14 = tpu.matmul %13, %3, %cst_8 {dimension_numbers = #tpu.dot_dimension_numbers<[1], [0], [0], [1], [0, 0, 1, 1], [], []>} : vector<1x64xf32>, vector<64x64xf32>, vector<1x64xf32> -> vector<1x64xf32>
    %cst_9 = arith.constant 5.120000e+02 : f32
    %15 = vector.broadcast %cst_9 : f32 to vector<1x64xf32>
    %16 = arith.divf %14, %15 : vector<1x64xf32>
    %cst_10 = arith.constant 9.99999974E-6 : f32
    %17 = vector.broadcast %cst_10 : f32 to vector<1x64xf32>
    %18 = arith.addf %16, %17 : vector<1x64xf32>
    %19 = math.rsqrt %18 : vector<1x64xf32>
    %c0_11 = arith.constant 0 : index
    %c0_12 = arith.constant 0 : index
    %20 = vector.load %arg2[%c0_11, %c0_12] : memref<1x64xf32, #tpu.memory_space<vmem>>, vector<1x64xf32>
    %21 = arith.mulf %19, %20 : vector<1x64xf32>
    %22 = vector.broadcast %21 : vector<1x64xf32> to vector<256x64xf32>
    %23 = arith.mulf %10, %22 : vector<256x64xf32>
    %c0_13 = arith.constant 0 : index
    %c0_14 = arith.constant 0 : index
    %24 = vector.load %arg3[%c0_13, %c0_14] : memref<1x64xf32, #tpu.memory_space<vmem>>, vector<1x64xf32>
    %25 = vector.broadcast %24 : vector<1x64xf32> to vector<256x64xf32>
    %26 = arith.addf %23, %25 : vector<256x64xf32>
    %27 = arith.negf %26 : vector<256x64xf32>
    %28 = math.exp %27 : vector<256x64xf32>
    %cst_15 = arith.constant 1.000000e+00 : f32
    %29 = vector.broadcast %cst_15 : f32 to vector<256x64xf32>
    %30 = arith.addf %29, %28 : vector<256x64xf32>
    %31 = arith.divf %29, %30 : vector<256x64xf32>
    %32 = arith.mulf %26, %31 : vector<256x64xf32>
    %33 = vector.shape_cast %32 : vector<256x64xf32> to vector<16x16x64xf32>
    %cst_16 = arith.constant 0.000000e+00 : f32
    %34 = vector.broadcast %cst_16 : f32 to vector<1x16x64xf32>
    %cst_17 = arith.constant 0.000000e+00 : f32
    %35 = vector.broadcast %cst_17 : f32 to vector<18x1x64xf32>
    %36 = tpu.concatenate %34, %33, %34 in 0 : vector<1x16x64xf32>, vector<16x16x64xf32>, vector<1x16x64xf32> -> vector<18x16x64xf32>
    %37 = tpu.concatenate %35, %36, %35 in 1 : vector<18x1x64xf32>, vector<18x16x64xf32>, vector<18x1x64xf32> -> vector<18x18x64xf32>
    %38 = vector.extract_strided_slice %37 {offsets = [0, 0, 0], sizes = [16, 16, 64], strides = [1, 1, 1]} : vector<18x18x64xf32> to vector<16x16x64xf32>
    %39 = vector.shape_cast %38 : vector<16x16x64xf32> to vector<256x64xf32>
    %40 = vector.extract_strided_slice %37 {offsets = [0, 1, 0], sizes = [16, 16, 64], strides = [1, 1, 1]} : vector<18x18x64xf32> to vector<16x16x64xf32>
    %41 = vector.shape_cast %40 : vector<16x16x64xf32> to vector<256x64xf32>
    %42 = vector.extract_strided_slice %37 {offsets = [0, 2, 0], sizes = [16, 16, 64], strides = [1, 1, 1]} : vector<18x18x64xf32> to vector<16x16x64xf32>
    %43 = vector.shape_cast %42 : vector<16x16x64xf32> to vector<256x64xf32>
    %44 = vector.extract_strided_slice %37 {offsets = [1, 0, 0], sizes = [16, 16, 64], strides = [1, 1, 1]} : vector<18x18x64xf32> to vector<16x16x64xf32>
    %45 = vector.shape_cast %44 : vector<16x16x64xf32> to vector<256x64xf32>
    %46 = vector.extract_strided_slice %37 {offsets = [1, 1, 0], sizes = [16, 16, 64], strides = [1, 1, 1]} : vector<18x18x64xf32> to vector<16x16x64xf32>
    %47 = vector.shape_cast %46 : vector<16x16x64xf32> to vector<256x64xf32>
    %48 = vector.extract_strided_slice %37 {offsets = [1, 2, 0], sizes = [16, 16, 64], strides = [1, 1, 1]} : vector<18x18x64xf32> to vector<16x16x64xf32>
    %49 = vector.shape_cast %48 : vector<16x16x64xf32> to vector<256x64xf32>
    %50 = vector.extract_strided_slice %37 {offsets = [2, 0, 0], sizes = [16, 16, 64], strides = [1, 1, 1]} : vector<18x18x64xf32> to vector<16x16x64xf32>
    %51 = vector.shape_cast %50 : vector<16x16x64xf32> to vector<256x64xf32>
    %52 = vector.extract_strided_slice %37 {offsets = [2, 1, 0], sizes = [16, 16, 64], strides = [1, 1, 1]} : vector<18x18x64xf32> to vector<16x16x64xf32>
    %53 = vector.shape_cast %52 : vector<16x16x64xf32> to vector<256x64xf32>
    %54 = vector.extract_strided_slice %37 {offsets = [2, 2, 0], sizes = [16, 16, 64], strides = [1, 1, 1]} : vector<18x18x64xf32> to vector<16x16x64xf32>
    %55 = vector.shape_cast %54 : vector<16x16x64xf32> to vector<256x64xf32>
    %56 = tpu.concatenate %39, %41, %43, %45, %47, %49, %51, %53, %55 in 1 : vector<256x64xf32>, vector<256x64xf32>, vector<256x64xf32>, vector<256x64xf32>, vector<256x64xf32>, vector<256x64xf32>, vector<256x64xf32>, vector<256x64xf32>, vector<256x64xf32> -> vector<256x576xf32>
    %57 = arith.truncf %56 : vector<256x576xf32> to vector<256x576xbf16>
    %c0_18 = arith.constant 0 : index
    %c0_19 = arith.constant 0 : index
    %58 = vector.load %arg5[%c0_18, %c0_19] : memref<576x128xbf16, #tpu.memory_space<vmem>>, vector<576x128xbf16>
    %cst_20 = arith.constant dense<0.000000e+00> : vector<256x128xf32>
    %59 = tpu.matmul %57, %58, %cst_20 {dimension_numbers = #tpu.dot_dimension_numbers<[1], [0], [0], [1], [0, 0, 1, 1], [], []>} : vector<256x576xbf16>, vector<576x128xbf16>, vector<256x128xf32> -> vector<256x128xf32>
    %c0_21 = arith.constant 0 : index
    %c0_22 = arith.constant 0 : index
    %60 = vector.load %arg6[%c0_21, %c0_22] : memref<1x128xf32, #tpu.memory_space<vmem>>, vector<1x128xf32>
    %61 = vector.broadcast %60 : vector<1x128xf32> to vector<256x128xf32>
    %62 = arith.addf %59, %61 : vector<256x128xf32>
    %63 = vector.shape_cast %62 : vector<256x128xf32> to vector<16x16x128xf32>
    %64 = arith.truncf %63 : vector<16x16x128xf32> to vector<16x16x128xbf16>
    %c0_23 = arith.constant 0 : index
    %c0_24 = arith.constant 0 : index
    %c0_25 = arith.constant 0 : index
    %c0_26 = arith.constant 0 : index
    %65 = vector.load %arg7[%c0_23, %c0_24, %c0_25, %c0_26] : memref<1x16x16x128xbf16, #tpu.memory_space<vmem>>, vector<1x16x16x128xbf16>
    %66 = vector.shape_cast %65 : vector<1x16x16x128xbf16> to vector<16x16x128xbf16>
    %67 = vector.shape_cast %64 : vector<16x16x128xbf16> to vector<1x16x16x128xbf16>
    tpu.vector_store %arg7[%c0_23, %c0_24, %c0_25, %c0_26], %67 {strides = array<i32>} : memref<1x16x16x128xbf16, #tpu.memory_space<vmem>>, vector<1x16x16x128xbf16>,
    return
  }
  func.func @transform_0(%arg0: i32) -> (i32, i32, i32, i32) {
    %c0_i32 = arith.constant 0 : i32
    %c0_i32_0 = arith.constant 0 : i32
    %c0_i32_1 = arith.constant 0 : i32
    %c0_i32_2 = arith.constant 0 : i32
    return %arg0, %c0_i32, %c0_i32_0, %c0_i32_1 : i32, i32, i32, i32
  }
  func.func @transform_1(%arg0: i32) -> (i32, i32) {
    %c0_i32 = arith.constant 0 : i32
    %c0_i32_0 = arith.constant 0 : i32
    %c0_i32_1 = arith.constant 0 : i32
    return %c0_i32, %c0_i32_0 : i32, i32
  }
  func.func @transform_2(%arg0: i32) -> (i32, i32) {
    %c0_i32 = arith.constant 0 : i32
    %c0_i32_0 = arith.constant 0 : i32
    %c0_i32_1 = arith.constant 0 : i32
    return %c0_i32, %c0_i32_0 : i32, i32
  }
  func.func @transform_3(%arg0: i32) -> (i32, i32) {
    %c0_i32 = arith.constant 0 : i32
    %c0_i32_0 = arith.constant 0 : i32
    %c0_i32_1 = arith.constant 0 : i32
    return %c0_i32, %c0_i32_0 : i32, i32
  }
  func.func @transform_4(%arg0: i32) -> (i32, i32) {
    %c0_i32 = arith.constant 0 : i32
    %c0_i32_0 = arith.constant 0 : i32
    %c0_i32_1 = arith.constant 0 : i32
    return %c0_i32, %c0_i32_0 : i32, i32
  }
  func.func @transform_5(%arg0: i32) -> (i32, i32) {
    %c0_i32 = arith.constant 0 : i32
    %c0_i32_0 = arith.constant 0 : i32
    %c0_i32_1 = arith.constant 0 : i32
    return %c0_i32, %c0_i32_0 : i32, i32
  }
  func.func @transform_6(%arg0: i32) -> (i32, i32, i32, i32) {
    %c0_i32 = arith.constant 0 : i32
    %c0_i32_0 = arith.constant 0 : i32
    %c0_i32_1 = arith.constant 0 : i32
    %c0_i32_2 = arith.constant 0 : i32
    return %arg0, %c0_i32, %c0_i32_0, %c0_i32_1 : i32, i32, i32, i32
  }
}

</mosaic_0001>

<llo_original>
// kernel: unet_output_layer_fwd.1
$region0: #{unet_output_layer_fwd.1}
  #allocation0 [shape = 'u32[]', space=smem, size = 0x4, offset = 0x4, fixed_abs, tag = 'smem constant byte address 0x4 - core index']
  #allocation1 [shape = 'u32[144,128]{1,0:T(1,128)}', space=vmem, size = 0x12000, scoped, tag = 'internal scratch']
  %s0 = inlined_call_operand.hbm [shape: f32[2,16,16,64], index: 0, kind: input, shape index: {}]
  %s1 = inlined_call_operand.vmem [shape: f32[1,64], index: 1, kind: input, shape index: {}]
  %s2 = inlined_call_operand.vmem [shape: f32[1,64], index: 2, kind: input, shape index: {}]
  %s3 = inlined_call_operand.hbm [shape: f32[64,64], index: 3, kind: input, shape index: {}]
  %s4 = inlined_call_operand.hbm [shape: bf16[576,128], index: 4, kind: input, shape index: {}]
  %s5 = inlined_call_operand.vmem [shape: f32[1,128], index: 5, kind: input, shape index: {}]
  %s6 = inlined_call_operand.vmem [shape: bf16[2,16,16,128], index: 6, kind: output, shape index: {}]
  %s7 = sld [smem:[#allocation0]]
  $region69: #{unet_output_layer_fwd.1} parent=0
    _
  %s9 = ssub.s32 1, %s7
  %s10 = scalar_select 0, %s9, %s7
  $region1: #{unet_output_layer_fwd.1} parent=0
    #allocation2 [shape = 'u8[262144]{0}', space=vmem, size = 0x40000, scoped, tag = 'input window, operand 0']
    #allocation3 [shape = 's32[2]{0}', space=sflag, size = 0x8, scoped, tag = 'scoped memory for unet_output_layer_fwd.1']
    #allocation4 [shape = 'u8[32768]{0}', space=vmem, size = 0x8000, scoped, tag = 'input window, operand 3, single buffered']
    #allocation5 [shape = 's32[1]{0}', space=sflag, size = 0x4, scoped, tag = 'scoped memory for unet_output_layer_fwd.1']
    #allocation6 [shape = 'u8[147456]{0}', space=vmem, size = 0x24000, scoped, tag = 'input window, operand 4, single buffered']
    %11 = vsyncpa [#allocation3], 0
    %s12 = scalar_lea.sflag [#allocation3], 1
    %13 = vsyncpa %s12, 0
    %14 = vsyncpa [#allocation5], 0
    loop: start=0, step=1, limit=4
    $region2: #{unet_output_layer_fwd.1} parent=1 // loop_pre_header
      _
    $region3: #{unet_output_layer_fwd.1} parent=1 // loop_header
      %s16 = sphi 0, %s20
      %p17 = scmp.ge.s32.totalorder %s16, 4
      %s26 = sphi 0, %s28
      %s29 = sphi 0, %s26
      %s30 = sphi 0, %s29
      %s46 = sphi 0, %s30
      %s50 = sphi 0, %s50
      %s52 = sphi 0, %s50
      %s53 = sphi 0, %s52
      %s67 = sphi 0, %s53
      %s71 = sphi 0, %s71
      %s73 = sphi 0, %s71
      %s74 = sphi 0, %s73
      %s88 = sphi 0, %s74
      %s92 = sphi 0, %s92
      %s94 = sphi 0, %s92
      %s95 = sphi 0, %s94
      %s109 = sphi 0, %s95
      %s113 = sphi 0, %s113
      %s115 = sphi 0, %s113
      %s116 = sphi 0, %s115
      %s130 = sphi 0, %s116
      %s134 = sphi 0, %s134
      %s136 = sphi 0, %s134
      %s137 = sphi 0, %s136
      %s151 = sphi 0, %s137
      %s157 = sphi 0, %s159
      %s160 = sphi 0, %s157
      %s161 = sphi 0, %s160
      %s177 = sphi 0, %s161
    $region4: #{unet_output_layer_fwd.1} parent=1 // loop_header_branch
      %19 = sbr.rel (%p17) target = $region8
    $region5: #{unet_output_layer_fwd.1} parent=1 // loop_body
      %s21 = ssub.s32 %s16, 1
      %s22 = ssub.s32 %s16, 2
      %s23 = sadd.s32 %s16, 1
      %s24 = ssub.s32 %s16, %s23
      %p25 = scmp.eq.s32.totalorder %s24, 0
      %s27 = sadd.s32 %s26, 1
      %s28 = scalar_select %p25, %s26, %s27
      %p31 = pneg %p25
      %p32 = scmp.eq.s32.totalorder %s16, 1
      %p33 = por %p31, %p32
      %p34 = scmp.ne.s32.totalorder %s26, %s29
      %p35 = scmp.eq.s32.totalorder %s16, 0
      %p36 = por %p34, %p35
      %p37 = scmp.ne.s32.totalorder %s26, %s29
      %p38 = scmp.eq.s32.totalorder %s21, 1
      %p39 = por %p37, %p38
      %p40 = scmp.ne.s32.totalorder %s29, %s30
      %p41 = scmp.eq.s32.totalorder %s21, 0
      %p42 = por %p40, %p41
      %p43 = scmp.ne.s32.totalorder %s29, %s30
      %p44 = scmp.eq.s32.totalorder %s22, 1
      %p45 = por %p43, %p44
      %p47 = scmp.ne.s32.totalorder %s30, %s46
      %p48 = scmp.eq.s32.totalorder %s22, 0
      %p49 = por %p47, %p48
      %s51 = sadd.s32 %s50, 1
      %p54 = scmp.eq.s32.totalorder %s16, 1
      %p55 = scmp.ne.s32.totalorder %s50, %s52
      %p56 = scmp.eq.s32.totalorder %s16, 0
      %p57 = por %p55, %p56
      %p58 = scmp.ne.s32.totalorder %s50, %s52
      %p59 = scmp.eq.s32.totalorder %s21, 1
      %p60 = por %p58, %p59
      %p61 = scmp.ne.s32.totalorder %s52, %s53
      %p62 = scmp.eq.s32.totalorder %s21, 0
      %p63 = por %p61, %p62
      %p64 = scmp.ne.s32.totalorder %s52, %s53
      %p65 = scmp.eq.s32.totalorder %s22, 1
      %p66 = por %p64, %p65
      %p68 = scmp.ne.s32.totalorder %s53, %s67
      %p69 = scmp.eq.s32.totalorder %s22, 0
      %p70 = por %p68, %p69
      %s72 = sadd.s32 %s71, 1
      %p75 = scmp.eq.s32.totalorder %s16, 1
      %p76 = scmp.ne.s32.totalorder %s71, %s73
      %p77 = scmp.eq.s32.totalorder %s16, 0
      %p78 = por %p76, %p77
      %p79 = scmp.ne.s32.totalorder %s71, %s73
      %p80 = scmp.eq.s32.totalorder %s21, 1
      %p81 = por %p79, %p80
      %p82 = scmp.ne.s32.totalorder %s73, %s74
      %p83 = scmp.eq.s32.totalorder %s21, 0
      %p84 = por %p82, %p83
      %p85 = scmp.ne.s32.totalorder %s73, %s74
      %p86 = scmp.eq.s32.totalorder %s22, 1
      %p87 = por %p85, %p86
      %p89 = scmp.ne.s32.totalorder %s74, %s88
      %p90 = scmp.eq.s32.totalorder %s22, 0
      %p91 = por %p89, %p90
      %s93 = sadd.s32 %s92, 1
      %p96 = scmp.eq.s32.totalorder %s16, 1
      %p97 = scmp.ne.s32.totalorder %s92, %s94
      %p98 = scmp.eq.s32.totalorder %s16, 0
      %p99 = por %p97, %p98
      %p100 = scmp.ne.s32.totalorder %s92, %s94
      %p101 = scmp.eq.s32.totalorder %s21, 1
      %p102 = por %p100, %p101
      %p103 = scmp.ne.s32.totalorder %s94, %s95
      %p104 = scmp.eq.s32.totalorder %s21, 0
      %p105 = por %p103, %p104
      %p106 = scmp.ne.s32.totalorder %s94, %s95
      %p107 = scmp.eq.s32.totalorder %s22, 1
      %p108 = por %p106, %p107
      %p110 = scmp.ne.s32.totalorder %s95, %s109
      %p111 = scmp.eq.s32.totalorder %s22, 0
      %p112 = por %p110, %p111
      %s114 = sadd.s32 %s113, 1
      %p117 = scmp.eq.s32.totalorder %s16, 1
      %p118 = scmp.ne.s32.totalorder %s113, %s115
      %p119 = scmp.eq.s32.totalorder %s16, 0
      %p120 = por %p118, %p119
      %p121 = scmp.ne.s32.totalorder %s113, %s115
      %p122 = scmp.eq.s32.totalorder %s21, 1
      %p123 = por %p121, %p122
      %p124 = scmp.ne.s32.totalorder %s115, %s116
      %p125 = scmp.eq.s32.totalorder %s21, 0
      %p126 = por %p124, %p125
      %p127 = scmp.ne.s32.totalorder %s115, %s116
      %p128 = scmp.eq.s32.totalorder %s22, 1
      %p129 = por %p127, %p128
      %p131 = scmp.ne.s32.totalorder %s116, %s130
      %p132 = scmp.eq.s32.totalorder %s22, 0
      %p133 = por %p131, %p132
      %s135 = sadd.s32 %s134, 1
      %p138 = scmp.eq.s32.totalorder %s16, 1
      %p139 = scmp.ne.s32.totalorder %s134, %s136
      %p140 = scmp.eq.s32.totalorder %s16, 0
      %p141 = por %p139, %p140
      %p142 = scmp.ne.s32.totalorder %s134, %s136
      %p143 = scmp.eq.s32.totalorder %s21, 1
      %p144 = por %p142, %p143
      %p145 = scmp.ne.s32.totalorder %s136, %s137
      %p146 = scmp.eq.s32.totalorder %s21, 0
      %p147 = por %p145, %p146
      %p148 = scmp.ne.s32.totalorder %s136, %s137
      %p149 = scmp.eq.s32.totalorder %s22, 1
      %p150 = por %p148, %p149
      %p152 = scmp.ne.s32.totalorder %s137, %s151
      %p153 = scmp.eq.s32.totalorder %s22, 0
      %p154 = por %p152, %p153
      %s155 = ssub.s32 %s16, %s23
      %p156 = scmp.eq.s32.totalorder %s155, 0
      %s158 = sadd.s32 %s157, 1
      %s159 = scalar_select %p156, %s157, %s158
      %p162 = pneg %p156
      %p163 = scmp.eq.s32.totalorder %s16, 1
      %p164 = por %p162, %p163
      %p165 = scmp.ne.s32.totalorder %s157, %s160
      %p166 = scmp.eq.s32.totalorder %s16, 0
      %p167 = por %p165, %p166
      %p168 = scmp.ne.s32.totalorder %s157, %s160
      %p169 = scmp.eq.s32.totalorder %s21, 1
      %p170 = por %p168, %p169
      %p171 = scmp.ne.s32.totalorder %s160, %s161
      %p172 = scmp.eq.s32.totalorder %s21, 0
      %p173 = por %p171, %p172
      %p174 = scmp.ne.s32.totalorder %s160, %s161
      %p175 = scmp.eq.s32.totalorder %s22, 1
      %p176 = por %p174, %p175
      %p178 = scmp.ne.s32.totalorder %s161, %s177
      %p179 = scmp.eq.s32.totalorder %s22, 0
      %p180 = por %p178, %p179
      %p181 = scmp.le.s32.totalorder 1, %s16
      %p182 = scmp.lt.s32.totalorder %s16, 3
      %p183 = pnand %p181, %p182
      %p184 = pneg %p183
      // Predicated region
      $region9: #{unet_output_layer_fwd.1} parent=5 // pred_check
        _
      $region10: #{unet_output_layer_fwd.1} parent=5 // pred_check_branch
        %186 = sbr.rel (%p183) target = $region12
      $region11: #{unet_output_layer_fwd.1} parent=5 // pred_region
        %s187 = ssub.s32 %s16, 1
        // Predicated region
        $region13: #{unet_output_layer_fwd.1} parent=11 // pred_check
          %p188 = pneg %p63
        $region14: #{unet_output_layer_fwd.1} parent=11 // pred_check_branch
          %190 = sbr.rel (%p188) target = $region16
        $region15: #{unet_output_layer_fwd.1} parent=11 // pred_region
          _
        $region16: #{unet_output_layer_fwd.1} parent=11 // pred_fallthru
          _
        // Predicated region
        $region17: #{unet_output_layer_fwd.1} parent=11 // pred_check
          %p191 = pneg %p84
        $region18: #{unet_output_layer_fwd.1} parent=11 // pred_check_branch
          %193 = sbr.rel (%p191) target = $region20
        $region19: #{unet_output_layer_fwd.1} parent=11 // pred_region
          _
        $region20: #{unet_output_layer_fwd.1} parent=11 // pred_fallthru
          _
        // Predicated region
        $region21: #{unet_output_layer_fwd.1} parent=11 // pred_check
          %p194 = pneg %p105
        $region22: #{unet_output_layer_fwd.1} parent=11 // pred_check_branch
          %196 = sbr.rel (%p194) target = $region24
        $region23: #{unet_output_layer_fwd.1} parent=11 // pred_region
          %s198 = ssub.s32 1024, 1024
          %199 = vsyncadd [#allocation5], %s198
          %s200 = sshll.u32 [#allocation4], 4
          %s201 = int_to_ptr.vmem [resolvable:$true] %s200
          %206 = dma.hbm_to_vmem [thread:$0]  %s3, 1024, %s201, [#allocation5], 128, 128, 8
        $region24: #{unet_output_layer_fwd.1} parent=11 // pred_fallthru
          _
        // Predicated region
        $region25: #{unet_output_layer_fwd.1} parent=11 // pred_check
          %p207 = pneg %p126
        $region26: #{unet_output_layer_fwd.1} parent=11 // pred_check_branch
          %209 = sbr.rel (%p207) target = $region28
        $region27: #{unet_output_layer_fwd.1} parent=11 // pred_region
          %s211 = ssub.s32 4608, 4608
          %212 = vsyncadd [#allocation5], %s211
          %s213 = sshll.u32 [#allocation6], 4
          %s214 = int_to_ptr.vmem [resolvable:$true] %s213
          %219 = dma.hbm_to_vmem [thread:$0]  %s4, 4608, %s214, [#allocation5], 64, 64, 4
        $region28: #{unet_output_layer_fwd.1} parent=11 // pred_fallthru
          _
        // Predicated region
        $region29: #{unet_output_layer_fwd.1} parent=11 // pred_check
          %p220 = pneg %p147
        $region30: #{unet_output_layer_fwd.1} parent=11 // pred_check_branch
          %222 = sbr.rel (%p220) target = $region32
        $region31: #{unet_output_layer_fwd.1} parent=11 // pred_region
          _
        $region32: #{unet_output_layer_fwd.1} parent=11 // pred_fallthru
          _
      $region12: #{unet_output_layer_fwd.1} parent=5 // pred_fallthru
        _
      %p223 = scmp.lt.s32.totalorder %s16, 2
      // Predicated region
      $region33: #{unet_output_layer_fwd.1} parent=5 // pred_check
        %p224 = pneg %p223
      $region34: #{unet_output_layer_fwd.1} parent=5 // pred_check_branch
        %226 = sbr.rel (%p224) target = $region36
      $region35: #{unet_output_layer_fwd.1} parent=5 // pred_region
        // Predicated region
        $region37: #{unet_output_layer_fwd.1} parent=35 // pred_check
          %p227 = pneg %p36
        $region38: #{unet_output_layer_fwd.1} parent=35 // pred_check_branch
          %229 = sbr.rel (%p227) target = $region40
        $region39: #{unet_output_layer_fwd.1} parent=35 // pred_region
          %s230 = sand.u32 %s26, 1
          %s231 = scalar_lea.sflag [#allocation3], %s230
          %s232 = sand.u32 %s26, 1
          %s233 = smul.addr %s232, 256
          %s234 = scalar_lea.vmem [#allocation2], %s233
          %s236 = ssub.s32 4096, 4096
          %237 = vsyncadd %s231, %s236
          %s238 = smul.addr %s16, 32
          %s239 = smul.addr %s238, 128
          %s240 = scalar_lea.hbm %s0, %s239
          %s241 = sshll.u32 %s234, 4
          %s242 = int_to_ptr.vmem [resolvable:$true] %s241
          %247 = dma.hbm_to_vmem [thread:$0]  %s240, 4096, %s242, %s231, 128, 128, 8
        $region40: #{unet_output_layer_fwd.1} parent=35 // pred_fallthru
          _
      $region36: #{unet_output_layer_fwd.1} parent=5 // pred_fallthru
        _
      %p248 = scmp.le.s32.totalorder 1, %s16
      %p249 = scmp.lt.s32.totalorder %s16, 3
      %p250 = pnand %p248, %p249
      %p251 = pneg %p250
      // Predicated region
      $region41: #{unet_output_layer_fwd.1} parent=5 // pred_check
        _
      $region42: #{unet_output_layer_fwd.1} parent=5 // pred_check_branch
        %253 = sbr.rel (%p250) target = $region44
      $region43: #{unet_output_layer_fwd.1} parent=5 // pred_region
        %s254 = ssub.s32 %s16, 1
        %s255 = sand.u32 %s29, 1
        %s256 = scalar_lea.sflag [#allocation3], %s255
        %s257 = sand.u32 %s29, 1
        %s258 = smul.addr %s257, 256
        %s259 = scalar_lea.vmem [#allocation2], %s258
        // Predicated region
        $region45: #{unet_output_layer_fwd.1} parent=43 // pred_check
          %p260 = pneg %p42
        $region46: #{unet_output_layer_fwd.1} parent=43 // pred_check_branch
          %262 = sbr.rel (%p260) target = $region48
        $region47: #{unet_output_layer_fwd.1} parent=43 // pred_region
          %263 = dma.done %s256, 4096
        $region48: #{unet_output_layer_fwd.1} parent=43 // pred_fallthru
          _
        // Predicated region
        $region49: #{unet_output_layer_fwd.1} parent=43 // pred_check
          %p264 = pneg %p105
        $region50: #{unet_output_layer_fwd.1} parent=43 // pred_check_branch
          %266 = sbr.rel (%p264) target = $region52
        $region51: #{unet_output_layer_fwd.1} parent=43 // pred_region
          %267 = dma.done [#allocation5], 1024
        $region52: #{unet_output_layer_fwd.1} parent=43 // pred_fallthru
          _
        // Predicated region
        $region53: #{unet_output_layer_fwd.1} parent=43 // pred_check
          %p268 = pneg %p126
        $region54: #{unet_output_layer_fwd.1} parent=43 // pred_check_branch
          %270 = sbr.rel (%p268) target = $region56
        $region55: #{unet_output_layer_fwd.1} parent=43 // pred_region
          %271 = dma.done [#allocation5], 4608
        $region56: #{unet_output_layer_fwd.1} parent=43 // pred_fallthru
          _
        %s272 = sand.u32 %s29, 1
        %s273 = scalar_lea.sflag [#allocation3], %s272
        %s274 = sand.u32 %s29, 1
        %s275 = smul.addr %s274, 256
        %s276 = scalar_lea.vmem [#allocation2], %s275
        %p277 = pneg %p42
        %p278 = pneg %p39
        %p279 = pneg %p63
        %p280 = pneg %p60
        %p281 = pneg %p84
        %p282 = pneg %p81
        %p283 = pneg %p105
        %p284 = pneg %p102
        %p285 = pneg %p126
        %p286 = pneg %p123
        %p287 = pneg %p147
        %p288 = pneg %p144
        %p289 = pneg %p173
        %p290 = pneg %p170
        %p291 = scmp.lt.s32.totalorder %s21, 1
        %s292 = scalar_select %p291, %s21, 1
        %s293 = smul.addr %s292, 32
        %s294 = smul.addr %s293, 4
        %s295 = scalar_lea.vmem %s6, %s294
        %p296 = scmp.lt.s32.totalorder %s21, 1
        %s297 = scalar_select %p296, %s21, 1
        %s298 = smul.addr %s297, 32
        %s299 = smul.addr %s298, 4
        %s300 = scalar_lea.vmem %s6, %s299
        %v302 = vld [vmem:[%s259] sm:$0xff]
        %v303 = vld [vmem:[%s259 + $0x8] sm:$0xff]
        %v304 = vld [vmem:[%s259 + $0x10] sm:$0xff]
        %v305 = vld [vmem:[%s259 + $0x18] sm:$0xff]
        %v306 = vld [vmem:[%s259 + $0x20] sm:$0xff]
        %v307 = vld [vmem:[%s259 + $0x28] sm:$0xff]
        %v308 = vld [vmem:[%s259 + $0x30] sm:$0xff]
        %v309 = vld [vmem:[%s259 + $0x38] sm:$0xff]
        %v310 = vld [vmem:[%s259 + $0x40] sm:$0xff]
        %v311 = vld [vmem:[%s259 + $0x48] sm:$0xff]
        %v312 = vld [vmem:[%s259 + $0x50] sm:$0xff]
        %v313 = vld [vmem:[%s259 + $0x58] sm:$0xff]
        %v314 = vld [vmem:[%s259 + $0x60] sm:$0xff]
        %v315 = vld [vmem:[%s259 + $0x68] sm:$0xff]
        %v316 = vld [vmem:[%s259 + $0x70] sm:$0xff]
        %v317 = vld [vmem:[%s259 + $0x78] sm:$0xff]
        %v318 = vld [vmem:[%s259 + $0x80] sm:$0xff]
        %v319 = vld [vmem:[%s259 + $0x88] sm:$0xff]
        %v320 = vld [vmem:[%s259 + $0x90] sm:$0xff]
        %v321 = vld [vmem:[%s259 + $0x98] sm:$0xff]
        %v322 = vld [vmem:[%s259 + $0xa0] sm:$0xff]
        %v323 = vld [vmem:[%s259 + $0xa8] sm:$0xff]
        %v324 = vld [vmem:[%s259 + $0xb0] sm:$0xff]
        %v325 = vld [vmem:[%s259 + $0xb8] sm:$0xff]
        %v326 = vld [vmem:[%s259 + $0xc0] sm:$0xff]
        %v327 = vld [vmem:[%s259 + $0xc8] sm:$0xff]
        %v328 = vld [vmem:[%s259 + $0xd0] sm:$0xff]
        %v329 = vld [vmem:[%s259 + $0xd8] sm:$0xff]
        %v330 = vld [vmem:[%s259 + $0xe0] sm:$0xff]
        %v331 = vld [vmem:[%s259 + $0xe8] sm:$0xff]
        %v332 = vld [vmem:[%s259 + $0xf0] sm:$0xff]
        %v333 = vld [vmem:[%s259 + $0xf8] sm:$0xff]
        %v334 = vld [vmem:[#allocation4] sm:$0xff]
        %v335 = vld [vmem:[#allocation4 + $0x8] sm:$0xff]
        %v336 = vld [vmem:[#allocation4 + $0x10] sm:$0xff]
        %v337 = vld [vmem:[#allocation4 + $0x18] sm:$0xff]
        %v338 = vld [vmem:[#allocation4 + $0x20] sm:$0xff]
        %v339 = vld [vmem:[#allocation4 + $0x28] sm:$0xff]
        %v340 = vld [vmem:[#allocation4 + $0x30] sm:$0xff]
        %v341 = vld [vmem:[#allocation4 + $0x38] sm:$0xff]
        %vm342 = vcmask 523264
        %v343 = vsel %vm342, %v302, 0.0
        %v344 = vsel %vm342, %v303, 0.0
        %v345 = vadd.f32 %v343, %v344
        %v346 = vsel %vm342, %v304, 0.0
        %v347 = vadd.f32 %v345, %v346
        %v348 = vsel %vm342, %v305, 0.0
        %v349 = vadd.f32 %v347, %v348
        %v350 = vsel %vm342, %v306, 0.0
        %v351 = vadd.f32 %v349, %v350
        %v352 = vsel %vm342, %v307, 0.0
        %v353 = vadd.f32 %v351, %v352
        %v354 = vsel %vm342, %v308, 0.0
        %v355 = vadd.f32 %v353, %v354
        %v356 = vsel %vm342, %v309, 0.0
        %v357 = vadd.f32 %v355, %v356
        %v358 = vsel %vm342, %v310, 0.0
        %v359 = vadd.f32 %v357, %v358
        %v360 = vsel %vm342, %v311, 0.0
        %v361 = vadd.f32 %v359, %v360
        %v362 = vsel %vm342, %v312, 0.0
        %v363 = vadd.f32 %v361, %v362
        %v364 = vsel %vm342, %v313, 0.0
        %v365 = vadd.f32 %v363, %v364
        %v366 = vsel %vm342, %v314, 0.0
        %v367 = vadd.f32 %v365, %v366
        %v368 = vsel %vm342, %v315, 0.0
        %v369 = vadd.f32 %v367, %v368
        %v370 = vsel %vm342, %v316, 0.0
        %v371 = vadd.f32 %v369, %v370
        %v372 = vsel %vm342, %v317, 0.0
        %v373 = vadd.f32 %v371, %v372
        %v374 = vsel %vm342, %v318, 0.0
        %v375 = vadd.f32 %v373, %v374
        %v376 = vsel %vm342, %v319, 0.0
        %v377 = vadd.f32 %v375, %v376
        %v378 = vsel %vm342, %v320, 0.0
        %v379 = vadd.f32 %v377, %v378
        %v380 = vsel %vm342, %v321, 0.0
        %v381 = vadd.f32 %v379, %v380
        %v382 = vsel %vm342, %v322, 0.0
        %v383 = vadd.f32 %v381, %v382
        %v384 = vsel %vm342, %v323, 0.0
        %v385 = vadd.f32 %v383, %v384
        %v386 = vsel %vm342, %v324, 0.0
        %v387 = vadd.f32 %v385, %v386
        %v388 = vsel %vm342, %v325, 0.0
        %v389 = vadd.f32 %v387, %v388
        %v390 = vsel %vm342, %v326, 0.0
        %v391 = vadd.f32 %v389, %v390
        %v392 = vsel %vm342, %v327, 0.0
        %v393 = vadd.f32 %v391, %v392
        %v394 = vsel %vm342, %v328, 0.0
        %v395 = vadd.f32 %v393, %v394
        %v396 = vsel %vm342, %v329, 0.0
        %v397 = vadd.f32 %v395, %v396
        %v398 = vsel %vm342, %v330, 0.0
        %v399 = vadd.f32 %v397, %v398
        %v400 = vsel %vm342, %v331, 0.0
        %v401 = vadd.f32 %v399, %v400
        %v402 = vsel %vm342, %v332, 0.0
        %v403 = vadd.f32 %v401, %v402
        %v404 = vsel %vm342, %v333, 0.0
        %v405 = vadd.f32 %v403, %v404
        %v406 = vrot.slane %v405, 4
        %v407 = vadd.f32 %v405, %v406
        %v408 = vrot.slane %v407, 2
        %v409 = vadd.f32 %v407, %v408
        %v410 = vrot.slane %v409, 1
        %v411 = vadd.f32 %v409, %v410
        %v413 = vsel %vm342, %v411, 0
        %415 = vmatprep.subr.mxu0 0.0
        %416 = vmatpush1.msra.mxu0 0.0
        %417 = vmatprep.subr.mxu0 0.0
        %418 = vmatpush1.msra.mxu0 0.0
        %419 = vmatprep.subr.mxu0 0.0
        %420 = vmatpush1.msra.mxu0 0.0
        %421 = vmatprep.subr.mxu0 0.0
        %422 = vmatpush1.msra.mxu0 0.0
        %423 = vmatprep.subr.mxu0 0.0
        %424 = vmatpush1.msra.mxu0 0.0
        %425 = vmatprep.subr.mxu0 0.0
        %426 = vmatpush1.msra.mxu0 0.0
        %427 = vmatprep.subr.mxu0 0.0
        %428 = vmatpush1.msra.mxu0 0.0
        %429 = vmatprep.subr.mxu0 0.0
        %430 = vmatpush1.msra.mxu0 0.0
        %431 = vmatprep.subr.mxu0 0.0
        %432 = vmatpush1.msra.mxu0 %v341
        %433 = vmatprep.subr.mxu0 0.0
        %434 = vmatpush1.msra.mxu0 %v340
        %435 = vmatprep.subr.mxu0 0.0
        %436 = vmatpush1.msra.mxu0 %v339
        %437 = vmatprep.subr.mxu0 0.0
        %438 = vmatpush1.msra.mxu0 %v338
        %439 = vmatprep.subr.mxu0 0.0
        %440 = vmatpush1.msra.mxu0 %v337
        %441 = vmatprep.subr.mxu0 0.0
        %442 = vmatpush1.msra.mxu0 %v336
        %443 = vmatprep.subr.mxu0 0.0
        %444 = vmatpush1.msra.mxu0 %v335
        %445 = vmatprep.subr.mxu0 0.0
        %446 = vmatpush1.msra.mxu0 %v334
        %447 = vmatprep.subr.mxu0 0.0
        %448 = vmatpush2.msra.mxu0 0.0
        %449 = vmatprep.subr.mxu0 0.0
        %450 = vmatpush2.msra.mxu0 0.0
        %451 = vmatprep.subr.mxu0 0.0
        %452 = vmatpush2.msra.mxu0 0.0
        %453 = vmatprep.subr.mxu0 0.0
        %454 = vmatpush2.msra.mxu0 0.0
        %455 = vmatprep.subr.mxu0 0.0
        %456 = vmatpush2.msra.mxu0 0.0
        %457 = vmatprep.subr.mxu0 0.0
        %458 = vmatpush2.msra.mxu0 0.0
        %459 = vmatprep.subr.mxu0 0.0
        %460 = vmatpush2.msra.mxu0 0.0
        %461 = vmatprep.subr.mxu0 0.0
        %462 = vmatpush2.msra.mxu0 0.0
        %463 = vmatprep.subr.mxu0 0.0
        %464 = vmatpush2.msra.mxu0 0.0
        %465 = vmatprep.subr.mxu0 0.0
        %466 = vmatpush2.msra.mxu0 0.0
        %467 = vmatprep.subr.mxu0 0.0
        %468 = vmatpush2.msra.mxu0 0.0
        %469 = vmatprep.subr.mxu0 0.0
        %470 = vmatpush2.msra.mxu0 0.0
        %471 = vmatprep.subr.mxu0 0.0
        %472 = vmatpush2.msra.mxu0 0.0
        %473 = vmatprep.subr.mxu0 0.0
        %474 = vmatpush2.msra.mxu0 0.0
        %475 = vmatprep.subr.mxu0 0.0
        %476 = vmatpush2.msra.mxu0 0.0
        %477 = vmatprep.subr.mxu0 0.0
        %478 = vmatpush2.msra.mxu0 0.0
        %479 = vmatprep.mubr.f32.mxu0 0.0
        %480 = vmatmul.mubr.f32.gmra.mxu0 %v413
        %v481 = vpop.f32.mrf.mxu0
        %v482 = vadd.f32 0.0, %v481
        %v483 = vpop.f32.mrf.mxu0
        %484 = vdwg.mxu0
        %v485 = vrcp.pop 512.0
        %v486 = vmul.f32 %v482, %v485
        %v487 = vlaneseq
        %v488 = vshrl.u32 %v487, 7
        %v489 = vsub.s32 0, %v488
        %v490 = vrot.slane %v486, %v489
        %v491 = vsub.f32 %v302, %v490
        %v492 = vsub.f32 %v303, %v490
        %v493 = vsub.f32 %v304, %v490
        %v494 = vsub.f32 %v305, %v490
        %v495 = vsub.f32 %v306, %v490
        %v496 = vsub.f32 %v307, %v490
        %v497 = vsub.f32 %v308, %v490
        %v498 = vsub.f32 %v309, %v490
        %v499 = vsub.f32 %v310, %v490
        %v500 = vsub.f32 %v311, %v490
        %v501 = vsub.f32 %v312, %v490
        %v502 = vsub.f32 %v313, %v490
        %v503 = vsub.f32 %v314, %v490
        %v504 = vsub.f32 %v315, %v490
        %v505 = vsub.f32 %v316, %v490
        %v506 = vsub.f32 %v317, %v490
        %v507 = vsub.f32 %v318, %v490
        %v508 = vsub.f32 %v319, %v490
        %v509 = vsub.f32 %v320, %v490
        %v510 = vsub.f32 %v321, %v490
        %v511 = vsub.f32 %v322, %v490
        %v512 = vsub.f32 %v323, %v490
        %v513 = vsub.f32 %v324, %v490
        %v514 = vsub.f32 %v325, %v490
        %v515 = vsub.f32 %v326, %v490
        %v516 = vsub.f32 %v327, %v490
        %v517 = vsub.f32 %v328, %v490
        %v518 = vsub.f32 %v329, %v490
        %v519 = vsub.f32 %v330, %v490
        %v520 = vsub.f32 %v331, %v490
        %v521 = vsub.f32 %v332, %v490
        %v522 = vsub.f32 %v333, %v490
        %v523 = vmul.f32 %v491, %v491
        %v524 = vmul.f32 %v492, %v492
        %v525 = vmul.f32 %v493, %v493
        %v526 = vmul.f32 %v494, %v494
        %v527 = vmul.f32 %v495, %v495
        %v528 = vmul.f32 %v496, %v496
        %v529 = vmul.f32 %v497, %v497
        %v530 = vmul.f32 %v498, %v498
        %v531 = vmul.f32 %v499, %v499
        %v532 = vmul.f32 %v500, %v500
        %v533 = vmul.f32 %v501, %v501
        %v534 = vmul.f32 %v502, %v502
        %v535 = vmul.f32 %v503, %v503
        %v536 = vmul.f32 %v504, %v504
        %v537 = vmul.f32 %v505, %v505
        %v538 = vmul.f32 %v506, %v506
        %v539 = vmul.f32 %v507, %v507
        %v540 = vmul.f32 %v508, %v508
        %v541 = vmul.f32 %v509, %v509
        %v542 = vmul.f32 %v510, %v510
        %v543 = vmul.f32 %v511, %v511
        %v544 = vmul.f32 %v512, %v512
        %v545 = vmul.f32 %v513, %v513
        %v546 = vmul.f32 %v514, %v514
        %v547 = vmul.f32 %v515, %v515
        %v548 = vmul.f32 %v516, %v516
        %v549 = vmul.f32 %v517, %v517
        %v550 = vmul.f32 %v518, %v518
        %v551 = vmul.f32 %v519, %v519
        %v552 = vmul.f32 %v520, %v520
        %v553 = vmul.f32 %v521, %v521
        %v554 = vmul.f32 %v522, %v522
        %v555 = vsel %vm342, %v523, 0.0
        %v556 = vsel %vm342, %v524, 0.0
        %v557 = vadd.f32 %v555, %v556
        %v558 = vsel %vm342, %v525, 0.0
        %v559 = vadd.f32 %v557, %v558
        %v560 = vsel %vm342, %v526, 0.0
        %v561 = vadd.f32 %v559, %v560
        %v562 = vsel %vm342, %v527, 0.0
        %v563 = vadd.f32 %v561, %v562
        %v564 = vsel %vm342, %v528, 0.0
        %v565 = vadd.f32 %v563, %v564
        %v566 = vsel %vm342, %v529, 0.0
        %v567 = vadd.f32 %v565, %v566
        %v568 = vsel %vm342, %v530, 0.0
        %v569 = vadd.f32 %v567, %v568
        %v570 = vsel %vm342, %v531, 0.0
        %v571 = vadd.f32 %v569, %v570
        %v572 = vsel %vm342, %v532, 0.0
        %v573 = vadd.f32 %v571, %v572
        %v574 = vsel %vm342, %v533, 0.0
        %v575 = vadd.f32 %v573, %v574
        %v576 = vsel %vm342, %v534, 0.0
        %v577 = vadd.f32 %v575, %v576
        %v578 = vsel %vm342, %v535, 0.0
        %v579 = vadd.f32 %v577, %v578
        %v580 = vsel %vm342, %v536, 0.0
        %v581 = vadd.f32 %v579, %v580
        %v582 = vsel %vm342, %v537, 0.0
        %v583 = vadd.f32 %v581, %v582
        %v584 = vsel %vm342, %v538, 0.0
        %v585 = vadd.f32 %v583, %v584
        %v586 = vsel %vm342, %v539, 0.0
        %v587 = vadd.f32 %v585, %v586
        %v588 = vsel %vm342, %v540, 0.0
        %v589 = vadd.f32 %v587, %v588
        %v590 = vsel %vm342, %v541, 0.0
        %v591 = vadd.f32 %v589, %v590
        %v592 = vsel %vm342, %v542, 0.0
        %v593 = vadd.f32 %v591, %v592
        %v594 = vsel %vm342, %v543, 0.0
        %v595 = vadd.f32 %v593, %v594
        %v596 = vsel %vm342, %v544, 0.0
        %v597 = vadd.f32 %v595, %v596
        %v598 = vsel %vm342, %v545, 0.0
        %v599 = vadd.f32 %v597, %v598
        %v600 = vsel %vm342, %v546, 0.0
        %v601 = vadd.f32 %v599, %v600
        %v602 = vsel %vm342, %v547, 0.0
        %v603 = vadd.f32 %v601, %v602
        %v604 = vsel %vm342, %v548, 0.0
        %v605 = vadd.f32 %v603, %v604
        %v606 = vsel %vm342, %v549, 0.0
        %v607 = vadd.f32 %v605, %v606
        %v608 = vsel %vm342, %v550, 0.0
        %v609 = vadd.f32 %v607, %v608
        %v610 = vsel %vm342, %v551, 0.0
        %v611 = vadd.f32 %v609, %v610
        %v612 = vsel %vm342, %v552, 0.0
        %v613 = vadd.f32 %v611, %v612
        %v614 = vsel %vm342, %v553, 0.0
        %v615 = vadd.f32 %v613, %v614
        %v616 = vsel %vm342, %v554, 0.0
        %v617 = vadd.f32 %v615, %v616
        %v618 = vrot.slane %v617, 4
        %v619 = vadd.f32 %v617, %v618
        %v620 = vrot.slane %v619, 2
        %v621 = vadd.f32 %v619, %v620
        %v622 = vrot.slane %v621, 1
        %v623 = vadd.f32 %v621, %v622
        %v625 = vsel %vm342, %v623, 0
        %627 = vmatprep.subr.mxu0 0.0
        %628 = vmatpush1.msra.mxu0 0.0
        %629 = vmatprep.subr.mxu0 0.0
        %630 = vmatpush1.msra.mxu0 0.0
        %631 = vmatprep.subr.mxu0 0.0
        %632 = vmatpush1.msra.mxu0 0.0
        %633 = vmatprep.subr.mxu0 0.0
        %634 = vmatpush1.msra.mxu0 0.0
        %635 = vmatprep.subr.mxu0 0.0
        %636 = vmatpush1.msra.mxu0 0.0
        %637 = vmatprep.subr.mxu0 0.0
        %638 = vmatpush1.msra.mxu0 0.0
        %639 = vmatprep.subr.mxu0 0.0
        %640 = vmatpush1.msra.mxu0 0.0
        %641 = vmatprep.subr.mxu0 0.0
        %642 = vmatpush1.msra.mxu0 0.0
        %643 = vmatprep.subr.mxu0 0.0
        %644 = vmatpush1.msra.mxu0 %v341
        %645 = vmatprep.subr.mxu0 0.0
        %646 = vmatpush1.msra.mxu0 %v340
        %647 = vmatprep.subr.mxu0 0.0
        %648 = vmatpush1.msra.mxu0 %v339
        %649 = vmatprep.subr.mxu0 0.0
        %650 = vmatpush1.msra.mxu0 %v338
        %651 = vmatprep.subr.mxu0 0.0
        %652 = vmatpush1.msra.mxu0 %v337
        %653 = vmatprep.subr.mxu0 0.0
        %654 = vmatpush1.msra.mxu0 %v336
        %655 = vmatprep.subr.mxu0 0.0
        %656 = vmatpush1.msra.mxu0 %v335
        %657 = vmatprep.subr.mxu0 0.0
        %658 = vmatpush1.msra.mxu0 %v334
        %659 = vmatprep.subr.mxu0 0.0
        %660 = vmatpush2.msra.mxu0 0.0
        %661 = vmatprep.subr.mxu0 0.0
        %662 = vmatpush2.msra.mxu0 0.0
        %663 = vmatprep.subr.mxu0 0.0
        %664 = vmatpush2.msra.mxu0 0.0
        %665 = vmatprep.subr.mxu0 0.0
        %666 = vmatpush2.msra.mxu0 0.0
        %667 = vmatprep.subr.mxu0 0.0
        %668 = vmatpush2.msra.mxu0 0.0
        %669 = vmatprep.subr.mxu0 0.0
        %670 = vmatpush2.msra.mxu0 0.0
        %671 = vmatprep.subr.mxu0 0.0
        %672 = vmatpush2.msra.mxu0 0.0
        %673 = vmatprep.subr.mxu0 0.0
        %674 = vmatpush2.msra.mxu0 0.0
        %675 = vmatprep.subr.mxu0 0.0
        %676 = vmatpush2.msra.mxu0 0.0
        %677 = vmatprep.subr.mxu0 0.0
        %678 = vmatpush2.msra.mxu0 0.0
        %679 = vmatprep.subr.mxu0 0.0
        %680 = vmatpush2.msra.mxu0 0.0
        %681 = vmatprep.subr.mxu0 0.0
        %682 = vmatpush2.msra.mxu0 0.0
        %683 = vmatprep.subr.mxu0 0.0
        %684 = vmatpush2.msra.mxu0 0.0
        %685 = vmatprep.subr.mxu0 0.0
        %686 = vmatpush2.msra.mxu0 0.0
        %687 = vmatprep.subr.mxu0 0.0
        %688 = vmatpush2.msra.mxu0 0.0
        %689 = vmatprep.subr.mxu0 0.0
        %690 = vmatpush2.msra.mxu0 0.0
        %691 = vmatprep.mubr.f32.mxu0 0.0
        %692 = vmatmul.mubr.f32.gmra.mxu0 %v625
        %v693 = vpop.f32.mrf.mxu0
        %v694 = vadd.f32 0.0, %v693
        %v695 = vpop.f32.mrf.mxu0
        %696 = vdwg.mxu0
        %v697 = vmul.f32 %v694, %v485
        %v698 = vadd.f32 %v697, 1e-05
        %v699 = vrsqrt.pop %v698
        %v700 = vld [vmem:[%s1] sm:$0x1]
        %v701 = vmul.f32 %v699, %v700
        %v702 = vlaneseq
        %v703 = vshrl.u32 %v702, 7
        %v704 = vsub.s32 0, %v703
        %v705 = vrot.slane %v701, %v704
        %v706 = vmul.f32 %v491, %v705
        %v707 = vmul.f32 %v492, %v705
        %v708 = vmul.f32 %v493, %v705
        %v709 = vmul.f32 %v494, %v705
        %v710 = vmul.f32 %v495, %v705
        %v711 = vmul.f32 %v496, %v705
        %v712 = vmul.f32 %v497, %v705
        %v713 = vmul.f32 %v498, %v705
        %v714 = vmul.f32 %v499, %v705
        %v715 = vmul.f32 %v500, %v705
        %v716 = vmul.f32 %v501, %v705
        %v717 = vmul.f32 %v502, %v705
        %v718 = vmul.f32 %v503, %v705
        %v719 = vmul.f32 %v504, %v705
        %v720 = vmul.f32 %v505, %v705
        %v721 = vmul.f32 %v506, %v705
        %v722 = vmul.f32 %v507, %v705
        %v723 = vmul.f32 %v508, %v705
        %v724 = vmul.f32 %v509, %v705
        %v725 = vmul.f32 %v510, %v705
        %v726 = vmul.f32 %v511, %v705
        %v727 = vmul.f32 %v512, %v705
        %v728 = vmul.f32 %v513, %v705
        %v729 = vmul.f32 %v514, %v705
        %v730 = vmul.f32 %v515, %v705
        %v731 = vmul.f32 %v516, %v705
        %v732 = vmul.f32 %v517, %v705
        %v733 = vmul.f32 %v518, %v705
        %v734 = vmul.f32 %v519, %v705
        %v735 = vmul.f32 %v520, %v705
        %v736 = vmul.f32 %v521, %v705
        %v737 = vmul.f32 %v522, %v705
        %v738 = vld [vmem:[%s2] sm:$0x1]
        %v740 = vlaneseq
        %v741 = vshrl.u32 %v740, 7
        %v742 = vsub.s32 0, %v741
        %v743 = vrot.slane %v738, %v742
        %v745 = vadd.f32 %v706, %v743
        %v746 = vadd.f32 %v707, %v743
        %v747 = vadd.f32 %v708, %v743
        %v748 = vadd.f32 %v709, %v743
        %v749 = vadd.f32 %v710, %v743
        %v750 = vadd.f32 %v711, %v743
        %v751 = vadd.f32 %v712, %v743
        %v752 = vadd.f32 %v713, %v743
        %v753 = vadd.f32 %v714, %v743
        %v754 = vadd.f32 %v715, %v743
        %v755 = vadd.f32 %v716, %v743
        %v756 = vadd.f32 %v717, %v743
        %v757 = vadd.f32 %v718, %v743
        %v758 = vadd.f32 %v719, %v743
        %v759 = vadd.f32 %v720, %v743
        %v760 = vadd.f32 %v721, %v743
        %v761 = vadd.f32 %v722, %v743
        %v762 = vadd.f32 %v723, %v743
        %v763 = vadd.f32 %v724, %v743
        %v764 = vadd.f32 %v725, %v743
        %v765 = vadd.f32 %v726, %v743
        %v766 = vadd.f32 %v727, %v743
        %v767 = vadd.f32 %v728, %v743
        %v768 = vadd.f32 %v729, %v743
        %v769 = vadd.f32 %v730, %v743
        %v770 = vadd.f32 %v731, %v743
        %v771 = vadd.f32 %v732, %v743
        %v772 = vadd.f32 %v733, %v743
        %v773 = vadd.f32 %v734, %v743
        %v774 = vadd.f32 %v735, %v743
        %v775 = vadd.f32 %v736, %v743
        %v776 = vadd.f32 %v737, %v743
        %v777 = vxor.u32 %v745, 2147483648
        %v778 = vxor.u32 %v746, 2147483648
        %v779 = vxor.u32 %v747, 2147483648
        %v780 = vxor.u32 %v748, 2147483648
        %v781 = vxor.u32 %v749, 2147483648
        %v782 = vxor.u32 %v750, 2147483648
        %v783 = vxor.u32 %v751, 2147483648
        %v784 = vxor.u32 %v752, 2147483648
        %v785 = vxor.u32 %v753, 2147483648
        %v786 = vxor.u32 %v754, 2147483648
        %v787 = vxor.u32 %v755, 2147483648
        %v788 = vxor.u32 %v756, 2147483648
        %v789 = vxor.u32 %v757, 2147483648
        %v790 = vxor.u32 %v758, 2147483648
        %v791 = vxor.u32 %v759, 2147483648
        %v792 = vxor.u32 %v760, 2147483648
        %v793 = vxor.u32 %v761, 2147483648
        %v794 = vxor.u32 %v762, 2147483648
        %v795 = vxor.u32 %v763, 2147483648
        %v796 = vxor.u32 %v764, 2147483648
        %v797 = vxor.u32 %v765, 2147483648
        %v798 = vxor.u32 %v766, 2147483648
        %v799 = vxor.u32 %v767, 2147483648
        %v800 = vxor.u32 %v768, 2147483648
        %v801 = vxor.u32 %v769, 2147483648
        %v802 = vxor.u32 %v770, 2147483648
        %v803 = vxor.u32 %v771, 2147483648
        %v804 = vxor.u32 %v772, 2147483648
        %v805 = vxor.u32 %v773, 2147483648
        %v806 = vxor.u32 %v774, 2147483648
        %v807 = vxor.u32 %v775, 2147483648
        %v808 = vxor.u32 %v776, 2147483648
        %v809 = vmul.f32 %v777, 1.442695
        %v810 = vpow.pop %v809
        %v811 = vmul.f32 %v778, 1.442695
        %v812 = vpow.pop %v811
        %v813 = vmul.f32 %v779, 1.442695
        %v814 = vpow.pop %v813
        %v815 = vmul.f32 %v780, 1.442695
        %v816 = vpow.pop %v815
        %v817 = vmul.f32 %v781, 1.442695
        %v818 = vpow.pop %v817
        %v819 = vmul.f32 %v782, 1.442695
        %v820 = vpow.pop %v819
        %v821 = vmul.f32 %v783, 1.442695
        %v822 = vpow.pop %v821
        %v823 = vmul.f32 %v784, 1.442695
        %v824 = vpow.pop %v823
        %v825 = vmul.f32 %v785, 1.442695
        %v826 = vpow.pop %v825
        %v827 = vmul.f32 %v786, 1.442695
        %v828 = vpow.pop %v827
        %v829 = vmul.f32 %v787, 1.442695
        %v830 = vpow.pop %v829
        %v831 = vmul.f32 %v788, 1.442695
        %v832 = vpow.pop %v831
        %v833 = vmul.f32 %v789, 1.442695
        %v834 = vpow.pop %v833
        %v835 = vmul.f32 %v790, 1.442695
        %v836 = vpow.pop %v835
        %v837 = vmul.f32 %v791, 1.442695
        %v838 = vpow.pop %v837
        %v839 = vmul.f32 %v792, 1.442695
        %v840 = vpow.pop %v839
        %v841 = vmul.f32 %v793, 1.442695
        %v842 = vpow.pop %v841
        %v843 = vmul.f32 %v794, 1.442695
        %v844 = vpow.pop %v843
        %v845 = vmul.f32 %v795, 1.442695
        %v846 = vpow.pop %v845
        %v847 = vmul.f32 %v796, 1.442695
        %v848 = vpow.pop %v847
        %v849 = vmul.f32 %v797, 1.442695
        %v850 = vpow.pop %v849
        %v851 = vmul.f32 %v798, 1.442695
        %v852 = vpow.pop %v851
        %v853 = vmul.f32 %v799, 1.442695
        %v854 = vpow.pop %v853
        %v855 = vmul.f32 %v800, 1.442695
        %v856 = vpow.pop %v855
        %v857 = vmul.f32 %v801, 1.442695
        %v858 = vpow.pop %v857
        %v859 = vmul.f32 %v802, 1.442695
        %v860 = vpow.pop %v859
        %v861 = vmul.f32 %v803, 1.442695
        %v862 = vpow.pop %v861
        %v863 = vmul.f32 %v804, 1.442695
        %v864 = vpow.pop %v863
        %v865 = vmul.f32 %v805, 1.442695
        %v866 = vpow.pop %v865
        %v867 = vmul.f32 %v806, 1.442695
        %v868 = vpow.pop %v867
        %v869 = vmul.f32 %v807, 1.442695
        %v870 = vpow.pop %v869
        %v871 = vmul.f32 %v808, 1.442695
        %v872 = vpow.pop %v871
        %v873 = vadd.f32 %v810, 1.0
        %v874 = vadd.f32 %v812, 1.0
        %v875 = vadd.f32 %v814, 1.0
        %v876 = vadd.f32 %v816, 1.0
        %v877 = vadd.f32 %v818, 1.0
        %v878 = vadd.f32 %v820, 1.0
        %v879 = vadd.f32 %v822, 1.0
        %v880 = vadd.f32 %v824, 1.0
        %v881 = vadd.f32 %v826, 1.0
        %v882 = vadd.f32 %v828, 1.0
        %v883 = vadd.f32 %v830, 1.0
        %v884 = vadd.f32 %v832, 1.0
        %v885 = vadd.f32 %v834, 1.0
        %v886 = vadd.f32 %v836, 1.0
        %v887 = vadd.f32 %v838, 1.0
        %v888 = vadd.f32 %v840, 1.0
        %v889 = vadd.f32 %v842, 1.0
        %v890 = vadd.f32 %v844, 1.0
        %v891 = vadd.f32 %v846, 1.0
        %v892 = vadd.f32 %v848, 1.0
        %v893 = vadd.f32 %v850, 1.0
        %v894 = vadd.f32 %v852, 1.0
        %v895 = vadd.f32 %v854, 1.0
        %v896 = vadd.f32 %v856, 1.0
        %v897 = vadd.f32 %v858, 1.0
        %v898 = vadd.f32 %v860, 1.0
        %v899 = vadd.f32 %v862, 1.0
        %v900 = vadd.f32 %v864, 1.0
        %v901 = vadd.f32 %v866, 1.0
        %v902 = vadd.f32 %v868, 1.0
        %v903 = vadd.f32 %v870, 1.0
        %v904 = vadd.f32 %v872, 1.0
        %v905 = vrcp.pop %v873
        %v906 = vmul.f32 1.0, %v905
        %v907 = vrcp.pop %v874
        %v908 = vmul.f32 1.0, %v907
        %v909 = vrcp.pop %v875
        %v910 = vmul.f32 1.0, %v909
        %v911 = vrcp.pop %v876
        %v912 = vmul.f32 1.0, %v911
        %v913 = vrcp.pop %v877
        %v914 = vmul.f32 1.0, %v913
        %v915 = vrcp.pop %v878
        %v916 = vmul.f32 1.0, %v915
        %v917 = vrcp.pop %v879
        %v918 = vmul.f32 1.0, %v917
        %v919 = vrcp.pop %v880
        %v920 = vmul.f32 1.0, %v919
        %v921 = vrcp.pop %v881
        %v922 = vmul.f32 1.0, %v921
        %v923 = vrcp.pop %v882
        %v924 = vmul.f32 1.0, %v923
        %v925 = vrcp.pop %v883
        %v926 = vmul.f32 1.0, %v925
        %v927 = vrcp.pop %v884
        %v928 = vmul.f32 1.0, %v927
        %v929 = vrcp.pop %v885
        %v930 = vmul.f32 1.0, %v929
        %v931 = vrcp.pop %v886
        %v932 = vmul.f32 1.0, %v931
        %v933 = vrcp.pop %v887
        %v934 = vmul.f32 1.0, %v933
        %v935 = vrcp.pop %v888
        %v936 = vmul.f32 1.0, %v935
        %v937 = vrcp.pop %v889
        %v938 = vmul.f32 1.0, %v937
        %v939 = vrcp.pop %v890
        %v940 = vmul.f32 1.0, %v939
        %v941 = vrcp.pop %v891
        %v942 = vmul.f32 1.0, %v941
        %v943 = vrcp.pop %v892
        %v944 = vmul.f32 1.0, %v943
        %v945 = vrcp.pop %v893
        %v946 = vmul.f32 1.0, %v945
        %v947 = vrcp.pop %v894
        %v948 = vmul.f32 1.0, %v947
        %v949 = vrcp.pop %v895
        %v950 = vmul.f32 1.0, %v949
        %v951 = vrcp.pop %v896
        %v952 = vmul.f32 1.0, %v951
        %v953 = vrcp.pop %v897
        %v954 = vmul.f32 1.0, %v953
        %v955 = vrcp.pop %v898
        %v956 = vmul.f32 1.0, %v955
        %v957 = vrcp.pop %v899
        %v958 = vmul.f32 1.0, %v957
        %v959 = vrcp.pop %v900
        %v960 = vmul.f32 1.0, %v959
        %v961 = vrcp.pop %v901
        %v962 = vmul.f32 1.0, %v961
        %v963 = vrcp.pop %v902
        %v964 = vmul.f32 1.0, %v963
        %v965 = vrcp.pop %v903
        %v966 = vmul.f32 1.0, %v965
        %v967 = vrcp.pop %v904
        %v968 = vmul.f32 1.0, %v967
        %v969 = vmul.f32 %v745, %v906
        %v970 = vmul.f32 %v746, %v908
        %v971 = vmul.f32 %v747, %v910
        %v972 = vmul.f32 %v748, %v912
        %v973 = vmul.f32 %v749, %v914
        %v974 = vmul.f32 %v750, %v916
        %v975 = vmul.f32 %v751, %v918
        %v976 = vmul.f32 %v752, %v920
        %v977 = vmul.f32 %v753, %v922
        %v978 = vmul.f32 %v754, %v924
        %v979 = vmul.f32 %v755, %v926
        %v980 = vmul.f32 %v756, %v928
        %v981 = vmul.f32 %v757, %v930
        %v982 = vmul.f32 %v758, %v932
        %v983 = vmul.f32 %v759, %v934
        %v984 = vmul.f32 %v760, %v936
        %v985 = vmul.f32 %v761, %v938
        %v986 = vmul.f32 %v762, %v940
        %v987 = vmul.f32 %v763, %v942
        %v988 = vmul.f32 %v764, %v944
        %v989 = vmul.f32 %v765, %v946
        %v990 = vmul.f32 %v766, %v948
        %v991 = vmul.f32 %v767, %v950
        %v992 = vmul.f32 %v768, %v952
        %v993 = vmul.f32 %v769, %v954
        %v994 = vmul.f32 %v770, %v956
        %v995 = vmul.f32 %v771, %v958
        %v996 = vmul.f32 %v772, %v960
        %v997 = vmul.f32 %v773, %v962
        %v998 = vmul.f32 %v774, %v964
        %v999 = vmul.f32 %v775, %v966
        %v1000 = vmul.f32 %v776, %v968
        %vm1034 = vcmask 1040384
        %v1035 = vrot.slane 0.0, 7
        %v1036 = vsel %vm1034, %v1035, %v1035
        %v1037 = vrot.slane %v969, 7
        %v1038 = vrot.slane %v970, 7
        %v1039 = vsel %vm1034, %v1037, %v1038
        %v1040 = vrot.slane %v971, 7
        %v1041 = vrot.slane %v972, 7
        %v1042 = vsel %vm1034, %v1040, %v1041
        %v1043 = vrot.slane %v973, 7
        %v1044 = vrot.slane %v974, 7
        %v1045 = vsel %vm1034, %v1043, %v1044
        %v1046 = vrot.slane %v975, 7
        %v1047 = vrot.slane %v976, 7
        %v1048 = vsel %vm1034, %v1046, %v1047
        %v1049 = vrot.slane %v977, 7
        %v1050 = vrot.slane %v978, 7
        %v1051 = vsel %vm1034, %v1049, %v1050
        %v1052 = vrot.slane %v979, 7
        %v1053 = vrot.slane %v980, 7
        %v1054 = vsel %vm1034, %v1052, %v1053
        %v1055 = vrot.slane %v981, 7
        %v1056 = vrot.slane %v982, 7
        %v1057 = vsel %vm1034, %v1055, %v1056
        %v1058 = vrot.slane %v983, 7
        %v1059 = vrot.slane %v984, 7
        %v1060 = vsel %vm1034, %v1058, %v1059
        %v1061 = vrot.slane %v985, 7
        %v1062 = vrot.slane %v986, 7
        %v1063 = vsel %vm1034, %v1061, %v1062
        %v1064 = vrot.slane %v987, 7
        %v1065 = vrot.slane %v988, 7
        %v1066 = vsel %vm1034, %v1064, %v1065
        %v1067 = vrot.slane %v989, 7
        %v1068 = vrot.slane %v990, 7
        %v1069 = vsel %vm1034, %v1067, %v1068
        %v1070 = vrot.slane %v991, 7
        %v1071 = vrot.slane %v992, 7
        %v1072 = vsel %vm1034, %v1070, %v1071
        %v1073 = vrot.slane %v993, 7
        %v1074 = vrot.slane %v994, 7
        %v1075 = vsel %vm1034, %v1073, %v1074
        %v1076 = vrot.slane %v995, 7
        %v1077 = vrot.slane %v996, 7
        %v1078 = vsel %vm1034, %v1076, %v1077
        %v1079 = vrot.slane %v997, 7
        %v1080 = vrot.slane %v998, 7
        %v1081 = vsel %vm1034, %v1079, %v1080
        %v1082 = vrot.slane %v999, 7
        %v1083 = vrot.slane %v1000, 7
        %v1084 = vsel %vm1034, %v1082, %v1083
        %v1135 = vsel %vm1034, 0.0, %v1035
        %v1136 = vsel %vm1034, 0.0, %v1037
        %v1137 = vsel %vm1034, 0.0, %v1040
        %v1138 = vsel %vm1034, 0.0, %v1043
        %v1139 = vsel %vm1034, 0.0, %v1046
        %v1140 = vsel %vm1034, 0.0, %v1049
        %v1141 = vsel %vm1034, 0.0, %v1052
        %v1142 = vsel %vm1034, 0.0, %v1055
        %v1143 = vsel %vm1034, 0.0, %v1058
        %v1144 = vsel %vm1034, 0.0, %v1061
        %v1145 = vsel %vm1034, 0.0, %v1064
        %v1146 = vsel %vm1034, 0.0, %v1067
        %v1147 = vsel %vm1034, 0.0, %v1070
        %v1148 = vsel %vm1034, 0.0, %v1073
        %v1149 = vsel %vm1034, 0.0, %v1076
        %v1150 = vsel %vm1034, 0.0, %v1079
        %v1151 = vsel %vm1034, 0.0, %v1082
        %v1152 = vsel %vm1034, %v1035, 0.0
        %v1153 = vsel %vm1034, %v1038, 0.0
        %v1154 = vsel %vm1034, %v1041, 0.0
        %v1155 = vsel %vm1034, %v1044, 0.0
        %v1156 = vsel %vm1034, %v1047, 0.0
        %v1157 = vsel %vm1034, %v1050, 0.0
        %v1158 = vsel %vm1034, %v1053, 0.0
        %v1159 = vsel %vm1034, %v1056, 0.0
        %v1160 = vsel %vm1034, %v1059, 0.0
        %v1161 = vsel %vm1034, %v1062, 0.0
        %v1162 = vsel %vm1034, %v1065, 0.0
        %v1163 = vsel %vm1034, %v1068, 0.0
        %v1164 = vsel %vm1034, %v1071, 0.0
        %v1165 = vsel %vm1034, %v1074, 0.0
        %v1166 = vsel %vm1034, %v1077, 0.0
        %v1167 = vsel %vm1034, %v1080, 0.0
        %v1168 = vsel %vm1034, %v1083, 0.0
        %vm1201 = vcmask 1046528
        %v1202 = vrot.slane %v1135, 1
        %v1203 = vrot.slane %v1036, 1
        %v1204 = vsel %vm1201, %v1202, %v1203
        %v1205 = vrot.slane %v1152, 1
        %v1206 = vsel %vm1201, %v1203, %v1205
        %v1207 = vrot.slane %v1136, 1
        %v1208 = vrot.slane %v1039, 1
        %v1209 = vsel %vm1201, %v1207, %v1208
        %v1210 = vrot.slane %v1153, 1
        %v1211 = vsel %vm1201, %v1208, %v1210
        %v1212 = vrot.slane %v1137, 1
        %v1213 = vrot.slane %v1042, 1
        %v1214 = vsel %vm1201, %v1212, %v1213
        %v1215 = vrot.slane %v1154, 1
        %v1216 = vsel %vm1201, %v1213, %v1215
        %v1217 = vrot.slane %v1138, 1
        %v1218 = vrot.slane %v1045, 1
        %v1219 = vsel %vm1201, %v1217, %v1218
        %v1220 = vrot.slane %v1155, 1
        %v1221 = vsel %vm1201, %v1218, %v1220
        %v1222 = vrot.slane %v1139, 1
        %v1223 = vrot.slane %v1048, 1
        %v1224 = vsel %vm1201, %v1222, %v1223
        %v1225 = vrot.slane %v1156, 1
        %v1226 = vsel %vm1201, %v1223, %v1225
        %v1227 = vrot.slane %v1140, 1
        %v1228 = vrot.slane %v1051, 1
        %v1229 = vsel %vm1201, %v1227, %v1228
        %v1230 = vrot.slane %v1157, 1
        %v1231 = vsel %vm1201, %v1228, %v1230
        %v1232 = vrot.slane %v1141, 1
        %v1233 = vrot.slane %v1054, 1
        %v1234 = vsel %vm1201, %v1232, %v1233
        %v1235 = vrot.slane %v1158, 1
        %v1236 = vsel %vm1201, %v1233, %v1235
        %v1237 = vrot.slane %v1142, 1
        %v1238 = vrot.slane %v1057, 1
        %v1239 = vsel %vm1201, %v1237, %v1238
        %v1240 = vrot.slane %v1159, 1
        %v1241 = vsel %vm1201, %v1238, %v1240
        %v1242 = vrot.slane %v1143, 1
        %v1243 = vrot.slane %v1060, 1
        %v1244 = vsel %vm1201, %v1242, %v1243
        %v1245 = vrot.slane %v1160, 1
        %v1246 = vsel %vm1201, %v1243, %v1245
        %v1247 = vrot.slane %v1144, 1
        %v1248 = vrot.slane %v1063, 1
        %v1249 = vsel %vm1201, %v1247, %v1248
        %v1250 = vrot.slane %v1161, 1
        %v1251 = vsel %vm1201, %v1248, %v1250
        %v1252 = vrot.slane %v1145, 1
        %v1253 = vrot.slane %v1066, 1
        %v1254 = vsel %vm1201, %v1252, %v1253
        %v1255 = vrot.slane %v1162, 1
        %v1256 = vsel %vm1201, %v1253, %v1255
        %v1257 = vrot.slane %v1146, 1
        %v1258 = vrot.slane %v1069, 1
        %v1259 = vsel %vm1201, %v1257, %v1258
        %v1260 = vrot.slane %v1163, 1
        %v1261 = vsel %vm1201, %v1258, %v1260
        %v1262 = vrot.slane %v1147, 1
        %v1263 = vrot.slane %v1072, 1
        %v1264 = vsel %vm1201, %v1262, %v1263
        %v1265 = vrot.slane %v1164, 1
        %v1266 = vsel %vm1201, %v1263, %v1265
        %v1267 = vrot.slane %v1148, 1
        %v1268 = vrot.slane %v1075, 1
        %v1269 = vsel %vm1201, %v1267, %v1268
        %v1270 = vrot.slane %v1165, 1
        %v1271 = vsel %vm1201, %v1268, %v1270
        %v1272 = vrot.slane %v1149, 1
        %v1273 = vrot.slane %v1078, 1
        %v1274 = vsel %vm1201, %v1272, %v1273
        %v1275 = vrot.slane %v1166, 1
        %v1276 = vsel %vm1201, %v1273, %v1275
        %v1277 = vrot.slane %v1150, 1
        %v1278 = vrot.slane %v1081, 1
        %v1279 = vsel %vm1201, %v1277, %v1278
        %v1280 = vrot.slane %v1167, 1
        %v1281 = vsel %vm1201, %v1278, %v1280
        %vm1282 = vcmask 1045504
        %v1283 = vrot.slane %v1135, 2
        %v1284 = vrot.slane %v1036, 2
        %v1285 = vsel %vm1282, %v1283, %v1284
        %v1286 = vrot.slane %v1152, 2
        %v1287 = vsel %vm1282, %v1284, %v1286
        %v1288 = vrot.slane %v1136, 2
        %v1289 = vrot.slane %v1039, 2
        %v1290 = vsel %vm1282, %v1288, %v1289
        %v1291 = vrot.slane %v1153, 2
        %v1292 = vsel %vm1282, %v1289, %v1291
        %v1293 = vrot.slane %v1137, 2
        %v1294 = vrot.slane %v1042, 2
        %v1295 = vsel %vm1282, %v1293, %v1294
        %v1296 = vrot.slane %v1154, 2
        %v1297 = vsel %vm1282, %v1294, %v1296
        %v1298 = vrot.slane %v1138, 2
        %v1299 = vrot.slane %v1045, 2
        %v1300 = vsel %vm1282, %v1298, %v1299
        %v1301 = vrot.slane %v1155, 2
        %v1302 = vsel %vm1282, %v1299, %v1301
        %v1303 = vrot.slane %v1139, 2
        %v1304 = vrot.slane %v1048, 2
        %v1305 = vsel %vm1282, %v1303, %v1304
        %v1306 = vrot.slane %v1156, 2
        %v1307 = vsel %vm1282, %v1304, %v1306
        %v1308 = vrot.slane %v1140, 2
        %v1309 = vrot.slane %v1051, 2
        %v1310 = vsel %vm1282, %v1308, %v1309
        %v1311 = vrot.slane %v1157, 2
        %v1312 = vsel %vm1282, %v1309, %v1311
        %v1313 = vrot.slane %v1141, 2
        %v1314 = vrot.slane %v1054, 2
        %v1315 = vsel %vm1282, %v1313, %v1314
        %v1316 = vrot.slane %v1158, 2
        %v1317 = vsel %vm1282, %v1314, %v1316
        %v1318 = vrot.slane %v1142, 2
        %v1319 = vrot.slane %v1057, 2
        %v1320 = vsel %vm1282, %v1318, %v1319
        %v1321 = vrot.slane %v1159, 2
        %v1322 = vsel %vm1282, %v1319, %v1321
        %v1323 = vrot.slane %v1143, 2
        %v1324 = vrot.slane %v1060, 2
        %v1325 = vsel %vm1282, %v1323, %v1324
        %v1326 = vrot.slane %v1160, 2
        %v1327 = vsel %vm1282, %v1324, %v1326
        %v1328 = vrot.slane %v1144, 2
        %v1329 = vrot.slane %v1063, 2
        %v1330 = vsel %vm1282, %v1328, %v1329
        %v1331 = vrot.slane %v1161, 2
        %v1332 = vsel %vm1282, %v1329, %v1331
        %v1333 = vrot.slane %v1145, 2
        %v1334 = vrot.slane %v1066, 2
        %v1335 = vsel %vm1282, %v1333, %v1334
        %v1336 = vrot.slane %v1162, 2
        %v1337 = vsel %vm1282, %v1334, %v1336
        %v1338 = vrot.slane %v1146, 2
        %v1339 = vrot.slane %v1069, 2
        %v1340 = vsel %vm1282, %v1338, %v1339
        %v1341 = vrot.slane %v1163, 2
        %v1342 = vsel %vm1282, %v1339, %v1341
        %v1343 = vrot.slane %v1147, 2
        %v1344 = vrot.slane %v1072, 2
        %v1345 = vsel %vm1282, %v1343, %v1344
        %v1346 = vrot.slane %v1164, 2
        %v1347 = vsel %vm1282, %v1344, %v1346
        %v1348 = vrot.slane %v1148, 2
        %v1349 = vrot.slane %v1075, 2
        %v1350 = vsel %vm1282, %v1348, %v1349
        %v1351 = vrot.slane %v1165, 2
        %v1352 = vsel %vm1282, %v1349, %v1351
        %v1353 = vrot.slane %v1149, 2
        %v1354 = vrot.slane %v1078, 2
        %v1355 = vsel %vm1282, %v1353, %v1354
        %v1356 = vrot.slane %v1166, 2
        %v1357 = vsel %vm1282, %v1354, %v1356
        %v1358 = vrot.slane %v1150, 2
        %v1359 = vrot.slane %v1081, 2
        %v1360 = vsel %vm1282, %v1358, %v1359
        %v1361 = vrot.slane %v1167, 2
        %v1362 = vsel %vm1282, %v1359, %v1361
        %v1397 = vrot.slane %v1151, 1
        %v1398 = vrot.slane %v1084, 1
        %v1399 = vsel %vm1201, %v1397, %v1398
        %v1400 = vrot.slane %v1168, 1
        %v1401 = vsel %vm1201, %v1398, %v1400
        %v1434 = vrot.slane %v1151, 2
        %v1435 = vrot.slane %v1084, 2
        %v1436 = vsel %vm1282, %v1434, %v1435
        %v1437 = vrot.slane %v1168, 2
        %v1438 = vsel %vm1282, %v1435, %v1437
        %1441 = vrot.lane.b32.xlu0 %v1204, 64
        %v1442 = vpop.permute.xlu0 %1441
        %1443 = vrot.lane.b32.xlu0 %v1206, 64
        %v1444 = vpop.permute.xlu0 %1443
        %1445 = vrot.lane.b32.xlu0 %v1209, 64
        %v1446 = vpop.permute.xlu0 %1445
        %1447 = vrot.lane.b32.xlu0 %v1211, 64
        %v1448 = vpop.permute.xlu0 %1447
        %1449 = vrot.lane.b32.xlu0 %v1214, 64
        %v1450 = vpop.permute.xlu0 %1449
        %1451 = vrot.lane.b32.xlu0 %v1216, 64
        %v1452 = vpop.permute.xlu0 %1451
        %1453 = vrot.lane.b32.xlu0 %v1219, 64
        %v1454 = vpop.permute.xlu0 %1453
        %1455 = vrot.lane.b32.xlu0 %v1221, 64
        %v1456 = vpop.permute.xlu0 %1455
        %1457 = vrot.lane.b32.xlu0 %v1224, 64
        %v1458 = vpop.permute.xlu0 %1457
        %1459 = vrot.lane.b32.xlu0 %v1226, 64
        %v1460 = vpop.permute.xlu0 %1459
        %1461 = vrot.lane.b32.xlu0 %v1229, 64
        %v1462 = vpop.permute.xlu0 %1461
        %1463 = vrot.lane.b32.xlu0 %v1231, 64
        %v1464 = vpop.permute.xlu0 %1463
        %1465 = vrot.lane.b32.xlu0 %v1234, 64
        %v1466 = vpop.permute.xlu0 %1465
        %1467 = vrot.lane.b32.xlu0 %v1236, 64
        %v1468 = vpop.permute.xlu0 %1467
        %1469 = vrot.lane.b32.xlu0 %v1239, 64
        %v1470 = vpop.permute.xlu0 %1469
        %1471 = vrot.lane.b32.xlu0 %v1241, 64
        %v1472 = vpop.permute.xlu0 %1471
        %1473 = vrot.lane.b32.xlu0 %v1244, 64
        %v1474 = vpop.permute.xlu0 %1473
        %1475 = vrot.lane.b32.xlu0 %v1246, 64
        %v1476 = vpop.permute.xlu0 %1475
        %1477 = vrot.lane.b32.xlu0 %v1249, 64
        %v1478 = vpop.permute.xlu0 %1477
        %1479 = vrot.lane.b32.xlu0 %v1251, 64
        %v1480 = vpop.permute.xlu0 %1479
        %1481 = vrot.lane.b32.xlu0 %v1254, 64
        %v1482 = vpop.permute.xlu0 %1481
        %1483 = vrot.lane.b32.xlu0 %v1256, 64
        %v1484 = vpop.permute.xlu0 %1483
        %1485 = vrot.lane.b32.xlu0 %v1259, 64
        %v1486 = vpop.permute.xlu0 %1485
        %1487 = vrot.lane.b32.xlu0 %v1261, 64
        %v1488 = vpop.permute.xlu0 %1487
        %1489 = vrot.lane.b32.xlu0 %v1264, 64
        %v1490 = vpop.permute.xlu0 %1489
        %1491 = vrot.lane.b32.xlu0 %v1266, 64
        %v1492 = vpop.permute.xlu0 %1491
        %1493 = vrot.lane.b32.xlu0 %v1269, 64
        %v1494 = vpop.permute.xlu0 %1493
        %1495 = vrot.lane.b32.xlu0 %v1271, 64
        %v1496 = vpop.permute.xlu0 %1495
        %1497 = vrot.lane.b32.xlu0 %v1274, 64
        %v1498 = vpop.permute.xlu0 %1497
        %1499 = vrot.lane.b32.xlu0 %v1276, 64
        %v1500 = vpop.permute.xlu0 %1499
        %1501 = vrot.lane.b32.xlu0 %v1279, 64
        %v1502 = vpop.permute.xlu0 %1501
        %1503 = vrot.lane.b32.xlu0 %v1281, 64
        %v1504 = vpop.permute.xlu0 %1503
        %1537 = vrot.lane.b32.xlu0 %v1136, 64
        %v1538 = vpop.permute.xlu0 %1537
        %1539 = vrot.lane.b32.xlu0 %v1039, 64
        %v1540 = vpop.permute.xlu0 %1539
        %1541 = vrot.lane.b32.xlu0 %v1137, 64
        %v1542 = vpop.permute.xlu0 %1541
        %1543 = vrot.lane.b32.xlu0 %v1042, 64
        %v1544 = vpop.permute.xlu0 %1543
        %1545 = vrot.lane.b32.xlu0 %v1138, 64
        %v1546 = vpop.permute.xlu0 %1545
        %1547 = vrot.lane.b32.xlu0 %v1045, 64
        %v1548 = vpop.permute.xlu0 %1547
        %1549 = vrot.lane.b32.xlu0 %v1139, 64
        %v1550 = vpop.permute.xlu0 %1549
        %1551 = vrot.lane.b32.xlu0 %v1048, 64
        %v1552 = vpop.permute.xlu0 %1551
        %1553 = vrot.lane.b32.xlu0 %v1140, 64
        %v1554 = vpop.permute.xlu0 %1553
        %1555 = vrot.lane.b32.xlu0 %v1051, 64
        %v1556 = vpop.permute.xlu0 %1555
        %1557 = vrot.lane.b32.xlu0 %v1141, 64
        %v1558 = vpop.permute.xlu0 %1557
        %1559 = vrot.lane.b32.xlu0 %v1054, 64
        %v1560 = vpop.permute.xlu0 %1559
        %1561 = vrot.lane.b32.xlu0 %v1142, 64
        %v1562 = vpop.permute.xlu0 %1561
        %1563 = vrot.lane.b32.xlu0 %v1057, 64
        %v1564 = vpop.permute.xlu0 %1563
        %1565 = vrot.lane.b32.xlu0 %v1143, 64
        %v1566 = vpop.permute.xlu0 %1565
        %1567 = vrot.lane.b32.xlu0 %v1060, 64
        %v1568 = vpop.permute.xlu0 %1567
        %1569 = vrot.lane.b32.xlu0 %v1144, 64
        %v1570 = vpop.permute.xlu0 %1569
        %1571 = vrot.lane.b32.xlu0 %v1063, 64
        %v1572 = vpop.permute.xlu0 %1571
        %1573 = vrot.lane.b32.xlu0 %v1145, 64
        %v1574 = vpop.permute.xlu0 %1573
        %1575 = vrot.lane.b32.xlu0 %v1066, 64
        %v1576 = vpop.permute.xlu0 %1575
        %1577 = vrot.lane.b32.xlu0 %v1146, 64
        %v1578 = vpop.permute.xlu0 %1577
        %1579 = vrot.lane.b32.xlu0 %v1069, 64
        %v1580 = vpop.permute.xlu0 %1579
        %1581 = vrot.lane.b32.xlu0 %v1147, 64
        %v1582 = vpop.permute.xlu0 %1581
        %1583 = vrot.lane.b32.xlu0 %v1072, 64
        %v1584 = vpop.permute.xlu0 %1583
        %1585 = vrot.lane.b32.xlu0 %v1148, 64
        %v1586 = vpop.permute.xlu0 %1585
        %1587 = vrot.lane.b32.xlu0 %v1075, 64
        %v1588 = vpop.permute.xlu0 %1587
        %1589 = vrot.lane.b32.xlu0 %v1149, 64
        %v1590 = vpop.permute.xlu0 %1589
        %1591 = vrot.lane.b32.xlu0 %v1078, 64
        %v1592 = vpop.permute.xlu0 %1591
        %1593 = vrot.lane.b32.xlu0 %v1150, 64
        %v1594 = vpop.permute.xlu0 %1593
        %1595 = vrot.lane.b32.xlu0 %v1081, 64
        %v1596 = vpop.permute.xlu0 %1595
        %1597 = vrot.lane.b32.xlu0 %v1151, 64
        %v1598 = vpop.permute.xlu0 %1597
        %1599 = vrot.lane.b32.xlu0 %v1084, 64
        %v1600 = vpop.permute.xlu0 %1599
        %1633 = vrot.lane.b32.xlu0 %v1290, 64
        %v1634 = vpop.permute.xlu0 %1633
        %1635 = vrot.lane.b32.xlu0 %v1292, 64
        %v1636 = vpop.permute.xlu0 %1635
        %1637 = vrot.lane.b32.xlu0 %v1295, 64
        %v1638 = vpop.permute.xlu0 %1637
        %1639 = vrot.lane.b32.xlu0 %v1297, 64
        %v1640 = vpop.permute.xlu0 %1639
        %1641 = vrot.lane.b32.xlu0 %v1300, 64
        %v1642 = vpop.permute.xlu0 %1641
        %1643 = vrot.lane.b32.xlu0 %v1302, 64
        %v1644 = vpop.permute.xlu0 %1643
        %1645 = vrot.lane.b32.xlu0 %v1305, 64
        %v1646 = vpop.permute.xlu0 %1645
        %1647 = vrot.lane.b32.xlu0 %v1307, 64
        %v1648 = vpop.permute.xlu0 %1647
        %1649 = vrot.lane.b32.xlu0 %v1310, 64
        %v1650 = vpop.permute.xlu0 %1649
        %1651 = vrot.lane.b32.xlu0 %v1312, 64
        %v1652 = vpop.permute.xlu0 %1651
        %1653 = vrot.lane.b32.xlu0 %v1315, 64
        %v1654 = vpop.permute.xlu0 %1653
        %1655 = vrot.lane.b32.xlu0 %v1317, 64
        %v1656 = vpop.permute.xlu0 %1655
        %1657 = vrot.lane.b32.xlu0 %v1320, 64
        %v1658 = vpop.permute.xlu0 %1657
        %1659 = vrot.lane.b32.xlu0 %v1322, 64
        %v1660 = vpop.permute.xlu0 %1659
        %1661 = vrot.lane.b32.xlu0 %v1325, 64
        %v1662 = vpop.permute.xlu0 %1661
        %1663 = vrot.lane.b32.xlu0 %v1327, 64
        %v1664 = vpop.permute.xlu0 %1663
        %1665 = vrot.lane.b32.xlu0 %v1330, 64
        %v1666 = vpop.permute.xlu0 %1665
        %1667 = vrot.lane.b32.xlu0 %v1332, 64
        %v1668 = vpop.permute.xlu0 %1667
        %1669 = vrot.lane.b32.xlu0 %v1335, 64
        %v1670 = vpop.permute.xlu0 %1669
        %1671 = vrot.lane.b32.xlu0 %v1337, 64
        %v1672 = vpop.permute.xlu0 %1671
        %1673 = vrot.lane.b32.xlu0 %v1340, 64
        %v1674 = vpop.permute.xlu0 %1673
        %1675 = vrot.lane.b32.xlu0 %v1342, 64
        %v1676 = vpop.permute.xlu0 %1675
        %1677 = vrot.lane.b32.xlu0 %v1345, 64
        %v1678 = vpop.permute.xlu0 %1677
        %1679 = vrot.lane.b32.xlu0 %v1347, 64
        %v1680 = vpop.permute.xlu0 %1679
        %1681 = vrot.lane.b32.xlu0 %v1350, 64
        %v1682 = vpop.permute.xlu0 %1681
        %1683 = vrot.lane.b32.xlu0 %v1352, 64
        %v1684 = vpop.permute.xlu0 %1683
        %1685 = vrot.lane.b32.xlu0 %v1355, 64
        %v1686 = vpop.permute.xlu0 %1685
        %1687 = vrot.lane.b32.xlu0 %v1357, 64
        %v1688 = vpop.permute.xlu0 %1687
        %1689 = vrot.lane.b32.xlu0 %v1360, 64
        %v1690 = vpop.permute.xlu0 %1689
        %1691 = vrot.lane.b32.xlu0 %v1362, 64
        %v1692 = vpop.permute.xlu0 %1691
        %1693 = vrot.lane.b32.xlu0 %v1436, 64
        %v1694 = vpop.permute.xlu0 %1693
        %1695 = vrot.lane.b32.xlu0 %v1438, 64
        %v1696 = vpop.permute.xlu0 %1695
        %1729 = vrot.lane.b32.xlu0 %v1399, 64
        %v1730 = vpop.permute.xlu0 %1729
        %1731 = vrot.lane.b32.xlu0 %v1401, 64
        %v1732 = vpop.permute.xlu0 %1731
        %v1735 = vsel %vm342, %v1135, %v1442
        %v1736 = vsel %vm342, %v1036, %v1444
        %v1737 = vsel %vm342, %v1136, %v1446
        %v1738 = vsel %vm342, %v1039, %v1448
        %v1739 = vsel %vm342, %v1137, %v1450
        %v1740 = vsel %vm342, %v1042, %v1452
        %v1741 = vsel %vm342, %v1138, %v1454
        %v1742 = vsel %vm342, %v1045, %v1456
        %v1743 = vsel %vm342, %v1139, %v1458
        %v1744 = vsel %vm342, %v1048, %v1460
        %v1745 = vsel %vm342, %v1140, %v1462
        %v1746 = vsel %vm342, %v1051, %v1464
        %v1747 = vsel %vm342, %v1141, %v1466
        %v1748 = vsel %vm342, %v1054, %v1468
        %v1749 = vsel %vm342, %v1142, %v1470
        %v1750 = vsel %vm342, %v1057, %v1472
        %v1751 = vsel %vm342, %v1143, %v1474
        %v1752 = vsel %vm342, %v1060, %v1476
        %v1753 = vsel %vm342, %v1144, %v1478
        %v1754 = vsel %vm342, %v1063, %v1480
        %v1755 = vsel %vm342, %v1145, %v1482
        %v1756 = vsel %vm342, %v1066, %v1484
        %v1757 = vsel %vm342, %v1146, %v1486
        %v1758 = vsel %vm342, %v1069, %v1488
        %v1759 = vsel %vm342, %v1147, %v1490
        %v1760 = vsel %vm342, %v1072, %v1492
        %v1761 = vsel %vm342, %v1148, %v1494
        %v1762 = vsel %vm342, %v1075, %v1496
        %v1763 = vsel %vm342, %v1149, %v1498
        %v1764 = vsel %vm342, %v1078, %v1500
        %v1765 = vsel %vm342, %v1150, %v1502
        %v1766 = vsel %vm342, %v1081, %v1504
        %v1767 = vsel %vm342, %v1285, %v1538
        %v1768 = vsel %vm342, %v1287, %v1540
        %v1769 = vsel %vm342, %v1290, %v1542
        %v1770 = vsel %vm342, %v1292, %v1544
        %v1771 = vsel %vm342, %v1295, %v1546
        %v1772 = vsel %vm342, %v1297, %v1548
        %v1773 = vsel %vm342, %v1300, %v1550
        %v1774 = vsel %vm342, %v1302, %v1552
        %v1775 = vsel %vm342, %v1305, %v1554
        %v1776 = vsel %vm342, %v1307, %v1556
        %v1777 = vsel %vm342, %v1310, %v1558
        %v1778 = vsel %vm342, %v1312, %v1560
        %v1779 = vsel %vm342, %v1315, %v1562
        %v1780 = vsel %vm342, %v1317, %v1564
        %v1781 = vsel %vm342, %v1320, %v1566
        %v1782 = vsel %vm342, %v1322, %v1568
        %v1783 = vsel %vm342, %v1325, %v1570
        %v1784 = vsel %vm342, %v1327, %v1572
        %v1785 = vsel %vm342, %v1330, %v1574
        %v1786 = vsel %vm342, %v1332, %v1576
        %v1787 = vsel %vm342, %v1335, %v1578
        %v1788 = vsel %vm342, %v1337, %v1580
        %v1789 = vsel %vm342, %v1340, %v1582
        %v1790 = vsel %vm342, %v1342, %v1584
        %v1791 = vsel %vm342, %v1345, %v1586
        %v1792 = vsel %vm342, %v1347, %v1588
        %v1793 = vsel %vm342, %v1350, %v1590
        %v1794 = vsel %vm342, %v1352, %v1592
        %v1795 = vsel %vm342, %v1355, %v1594
        %v1796 = vsel %vm342, %v1357, %v1596
        %v1797 = vsel %vm342, %v1360, %v1598
        %v1798 = vsel %vm342, %v1362, %v1600
        %v1799 = vsel %vm342, %v1209, %v1634
        %v1800 = vsel %vm342, %v1211, %v1636
        %v1801 = vsel %vm342, %v1214, %v1638
        %v1802 = vsel %vm342, %v1216, %v1640
        %v1803 = vsel %vm342, %v1219, %v1642
        %v1804 = vsel %vm342, %v1221, %v1644
        %v1805 = vsel %vm342, %v1224, %v1646
        %v1806 = vsel %vm342, %v1226, %v1648
        %v1807 = vsel %vm342, %v1229, %v1650
        %v1808 = vsel %vm342, %v1231, %v1652
        %v1809 = vsel %vm342, %v1234, %v1654
        %v1810 = vsel %vm342, %v1236, %v1656
        %v1811 = vsel %vm342, %v1239, %v1658
        %v1812 = vsel %vm342, %v1241, %v1660
        %v1813 = vsel %vm342, %v1244, %v1662
        %v1814 = vsel %vm342, %v1246, %v1664
        %v1815 = vsel %vm342, %v1249, %v1666
        %v1816 = vsel %vm342, %v1251, %v1668
        %v1817 = vsel %vm342, %v1254, %v1670
        %v1818 = vsel %vm342, %v1256, %v1672
        %v1819 = vsel %vm342, %v1259, %v1674
        %v1820 = vsel %vm342, %v1261, %v1676
        %v1821 = vsel %vm342, %v1264, %v1678
        %v1822 = vsel %vm342, %v1266, %v1680
        %v1823 = vsel %vm342, %v1269, %v1682
        %v1824 = vsel %vm342, %v1271, %v1684
        %v1825 = vsel %vm342, %v1274, %v1686
        %v1826 = vsel %vm342, %v1276, %v1688
        %v1827 = vsel %vm342, %v1279, %v1690
        %v1828 = vsel %vm342, %v1281, %v1692
        %v1829 = vsel %vm342, %v1399, %v1694
        %v1830 = vsel %vm342, %v1401, %v1696
        %v1831 = vsel %vm342, %v1151, %v1730
        %v1832 = vsel %vm342, %v1084, %v1732
        %v1833 = vpack.c.bf16 %v1736, %v1735
        %v1834 = vpack.c.bf16 %v1768, %v1767
        %v1835 = vpack.c.bf16 %v1800, %v1799
        %v1836 = vpack.c.bf16 %v1740, %v1739
        %v1837 = vpack.c.bf16 %v1297, %v1295
        %v1838 = vpack.c.bf16 %v1738, %v1737
        %v1839 = vpack.c.bf16 %v1770, %v1769
        %v1840 = vpack.c.bf16 %v1802, %v1801
        %v1841 = vpack.c.bf16 %v1742, %v1741
        %v1842 = vpack.c.bf16 %v1302, %v1300
        %v1843 = vpack.c.bf16 %v1772, %v1771
        %v1844 = vpack.c.bf16 %v1804, %v1803
        %v1845 = vpack.c.bf16 %v1744, %v1743
        %v1846 = vpack.c.bf16 %v1307, %v1305
        %v1847 = vpack.c.bf16 %v1774, %v1773
        %v1848 = vpack.c.bf16 %v1806, %v1805
        %v1849 = vpack.c.bf16 %v1746, %v1745
        %v1850 = vpack.c.bf16 %v1312, %v1310
        %v1851 = vpack.c.bf16 %v1776, %v1775
        %v1852 = vpack.c.bf16 %v1808, %v1807
        %v1853 = vpack.c.bf16 %v1748, %v1747
        %v1854 = vpack.c.bf16 %v1317, %v1315
        %v1855 = vpack.c.bf16 %v1778, %v1777
        %v1856 = vpack.c.bf16 %v1810, %v1809
        %v1857 = vpack.c.bf16 %v1750, %v1749
        %v1858 = vpack.c.bf16 %v1322, %v1320
        %v1859 = vpack.c.bf16 %v1780, %v1779
        %v1860 = vpack.c.bf16 %v1812, %v1811
        %v1861 = vpack.c.bf16 %v1752, %v1751
        %v1862 = vpack.c.bf16 %v1327, %v1325
        %v1863 = vpack.c.bf16 %v1782, %v1781
        %v1864 = vpack.c.bf16 %v1814, %v1813
        %v1865 = vpack.c.bf16 %v1754, %v1753
        %v1866 = vpack.c.bf16 %v1332, %v1330
        %v1867 = vpack.c.bf16 %v1784, %v1783
        %v1868 = vpack.c.bf16 %v1816, %v1815
        %v1869 = vpack.c.bf16 %v1756, %v1755
        %v1870 = vpack.c.bf16 %v1337, %v1335
        %v1871 = vpack.c.bf16 %v1786, %v1785
        %v1872 = vpack.c.bf16 %v1818, %v1817
        %v1873 = vpack.c.bf16 %v1758, %v1757
        %v1874 = vpack.c.bf16 %v1342, %v1340
        %v1875 = vpack.c.bf16 %v1788, %v1787
        %v1876 = vpack.c.bf16 %v1820, %v1819
        %v1877 = vpack.c.bf16 %v1760, %v1759
        %v1878 = vpack.c.bf16 %v1347, %v1345
        %v1879 = vpack.c.bf16 %v1790, %v1789
        %v1880 = vpack.c.bf16 %v1822, %v1821
        %v1881 = vpack.c.bf16 %v1762, %v1761
        %v1882 = vpack.c.bf16 %v1352, %v1350
        %v1883 = vpack.c.bf16 %v1792, %v1791
        %v1884 = vpack.c.bf16 %v1824, %v1823
        %v1885 = vpack.c.bf16 %v1764, %v1763
        %v1886 = vpack.c.bf16 %v1357, %v1355
        %v1887 = vpack.c.bf16 %v1794, %v1793
        %v1888 = vpack.c.bf16 %v1826, %v1825
        %v1889 = vpack.c.bf16 %v1766, %v1765
        %v1890 = vpack.c.bf16 %v1362, %v1360
        %v1891 = vpack.c.bf16 %v1796, %v1795
        %v1892 = vpack.c.bf16 %v1828, %v1827
        %v1893 = vpack.c.bf16 %v1832, %v1831
        %v1894 = vpack.c.bf16 %v1438, %v1436
        %v1895 = vpack.c.bf16 %v1798, %v1797
        %v1896 = vpack.c.bf16 %v1830, %v1829
        %v1897 = vpack.c.bf16 %v1287, %v1285
        %v1898 = vld [vmem:[#allocation6] sm:$0xf]
        %v1899 = vld [vmem:[#allocation6 + $0x4] sm:$0xf]
        %v1900 = vld [vmem:[#allocation6 + $0x8] sm:$0xf]
        %v1901 = vld [vmem:[#allocation6 + $0xc] sm:$0xf]
        %v1902 = vld [vmem:[#allocation6 + $0x10] sm:$0xf]
        %v1903 = vld [vmem:[#allocation6 + $0x14] sm:$0xf]
        %v1904 = vld [vmem:[#allocation6 + $0x18] sm:$0xf]
        %v1905 = vld [vmem:[#allocation6 + $0x1c] sm:$0xf]
        %v1906 = vld [vmem:[#allocation6 + $0x20] sm:$0xf]
        %v1907 = vld [vmem:[#allocation6 + $0x24] sm:$0xf]
        %v1908 = vld [vmem:[#allocation6 + $0x28] sm:$0xf]
        %v1909 = vld [vmem:[#allocation6 + $0x2c] sm:$0xf]
        %v1910 = vld [vmem:[#allocation6 + $0x30] sm:$0xf]
        %v1911 = vld [vmem:[#allocation6 + $0x34] sm:$0xf]
        %v1912 = vld [vmem:[#allocation6 + $0x38] sm:$0xf]
        %v1913 = vld [vmem:[#allocation6 + $0x3c] sm:$0xf]
        %v1914 = vld [vmem:[#allocation6 + $0x40] sm:$0xf]
        %v1915 = vld [vmem:[#allocation6 + $0x44] sm:$0xf]
        %v1916 = vld [vmem:[#allocation6 + $0x48] sm:$0xf]
        %v1917 = vld [vmem:[#allocation6 + $0x4c] sm:$0xf]
        %v1918 = vld [vmem:[#allocation6 + $0x50] sm:$0xf]
        %v1919 = vld [vmem:[#allocation6 + $0x54] sm:$0xf]
        %v1920 = vld [vmem:[#allocation6 + $0x58] sm:$0xf]
        %v1921 = vld [vmem:[#allocation6 + $0x5c] sm:$0xf]
        %v1922 = vld [vmem:[#allocation6 + $0x60] sm:$0xf]
        %v1923 = vld [vmem:[#allocation6 + $0x64] sm:$0xf]
        %v1924 = vld [vmem:[#allocation6 + $0x68] sm:$0xf]
        %v1925 = vld [vmem:[#allocation6 + $0x6c] sm:$0xf]
        %v1926 = vld [vmem:[#allocation6 + $0x70] sm:$0xf]
        %v1927 = vld [vmem:[#allocation6 + $0x74] sm:$0xf]
        %v1928 = vld [vmem:[#allocation6 + $0x78] sm:$0xf]
        %v1929 = vld [vmem:[#allocation6 + $0x7c] sm:$0xf]
        %v1930 = vld [vmem:[#allocation6 + $0x80] sm:$0xf]
        %v1931 = vld [vmem:[#allocation6 + $0x84] sm:$0xf]
        %v1932 = vld [vmem:[#allocation6 + $0x88] sm:$0xf]
        %v1933 = vld [vmem:[#allocation6 + $0x8c] sm:$0xf]
        %v1934 = vld [vmem:[#allocation6 + $0x90] sm:$0xf]
        %v1935 = vld [vmem:[#allocation6 + $0x94] sm:$0xf]
        %v1936 = vld [vmem:[#allocation6 + $0x98] sm:$0xf]
        %v1937 = vld [vmem:[#allocation6 + $0x9c] sm:$0xf]
        %v1938 = vld [vmem:[#allocation6 + $0xa0] sm:$0xf]
        %v1939 = vld [vmem:[#allocation6 + $0xa4] sm:$0xf]
        %v1940 = vld [vmem:[#allocation6 + $0xa8] sm:$0xf]
        %v1941 = vld [vmem:[#allocation6 + $0xac] sm:$0xf]
        %v1942 = vld [vmem:[#allocation6 + $0xb0] sm:$0xf]
        %v1943 = vld [vmem:[#allocation6 + $0xb4] sm:$0xf]
        %v1944 = vld [vmem:[#allocation6 + $0xb8] sm:$0xf]
        %v1945 = vld [vmem:[#allocation6 + $0xbc] sm:$0xf]
        %v1946 = vld [vmem:[#allocation6 + $0xc0] sm:$0xf]
        %v1947 = vld [vmem:[#allocation6 + $0xc4] sm:$0xf]
        %v1948 = vld [vmem:[#allocation6 + $0xc8] sm:$0xf]
        %v1949 = vld [vmem:[#allocation6 + $0xcc] sm:$0xf]
        %v1950 = vld [vmem:[#allocation6 + $0xd0] sm:$0xf]
        %v1951 = vld [vmem:[#allocation6 + $0xd4] sm:$0xf]
        %v1952 = vld [vmem:[#allocation6 + $0xd8] sm:$0xf]
        %v1953 = vld [vmem:[#allocation6 + $0xdc] sm:$0xf]
        %v1954 = vld [vmem:[#allocation6 + $0xe0] sm:$0xf]
        %v1955 = vld [vmem:[#allocation6 + $0xe4] sm:$0xf]
        %v1956 = vld [vmem:[#allocation6 + $0xe8] sm:$0xf]
        %v1957 = vld [vmem:[#allocation6 + $0xec] sm:$0xf]
        %v1958 = vld [vmem:[#allocation6 + $0xf0] sm:$0xf]
        %v1959 = vld [vmem:[#allocation6 + $0xf4] sm:$0xf]
        %v1960 = vld [vmem:[#allocation6 + $0xf8] sm:$0xf]
        %v1961 = vld [vmem:[#allocation6 + $0xfc] sm:$0xf]
        %v1962 = vld [vmem:[#allocation6 + $0x100] sm:$0xf]
        %v1963 = vld [vmem:[#allocation6 + $0x104] sm:$0xf]
        %v1964 = vld [vmem:[#allocation6 + $0x108] sm:$0xf]
        %v1965 = vld [vmem:[#allocation6 + $0x10c] sm:$0xf]
        %v1966 = vld [vmem:[#allocation6 + $0x110] sm:$0xf]
        %v1967 = vld [vmem:[#allocation6 + $0x114] sm:$0xf]
        %v1968 = vld [vmem:[#allocation6 + $0x118] sm:$0xf]
        %v1969 = vld [vmem:[#allocation6 + $0x11c] sm:$0xf]
        %v1970 = vld [vmem:[%s5] sm:$0x1]
        %v1972 = vlaneseq
        %v1973 = vshrl.u32 %v1972, 7
        %v1974 = vsub.s32 0, %v1973
        %v1975 = vrot.slane %v1970, %v1974
        %v2049 = vunpack.c.l.b16 %v1898
        %v2050 = vunpack.c.l.b16 %v1899
        %v2051 = vunpack.c.l.b16 %v1900
        %v2052 = vunpack.c.l.b16 %v1901
        %v2053 = vunpack.c.l.b16 %v1902
        %v2054 = vunpack.c.l.b16 %v1903
        %v2055 = vunpack.c.l.b16 %v1904
        %v2056 = vunpack.c.l.b16 %v1905
        %v2057 = vunpack.c.l.b16 %v1906
        %v2058 = vunpack.c.l.b16 %v1907
        %v2059 = vunpack.c.l.b16 %v1908
        %v2060 = vunpack.c.l.b16 %v1909
        %v2061 = vunpack.c.l.b16 %v1910
        %v2062 = vunpack.c.l.b16 %v1911
        %v2063 = vunpack.c.l.b16 %v1912
        %v2064 = vunpack.c.l.b16 %v1913
        %v2065 = vunpack.c.l.b16 %v1914
        %v2066 = vunpack.c.l.b16 %v1915
        %v2067 = vunpack.c.l.b16 %v1916
        %v2068 = vunpack.c.l.b16 %v1917
        %v2069 = vunpack.c.l.b16 %v1918
        %v2070 = vunpack.c.l.b16 %v1919
        %v2071 = vunpack.c.l.b16 %v1920
        %v2072 = vunpack.c.l.b16 %v1921
        %v2073 = vunpack.c.l.b16 %v1922
        %v2074 = vunpack.c.l.b16 %v1923
        %v2075 = vunpack.c.l.b16 %v1924
        %v2076 = vunpack.c.l.b16 %v1925
        %v2077 = vunpack.c.l.b16 %v1926
        %v2078 = vunpack.c.l.b16 %v1927
        %v2079 = vunpack.c.l.b16 %v1928
        %v2080 = vunpack.c.l.b16 %v1929
        %v2081 = vunpack.c.l.b16 %v1930
        %v2082 = vunpack.c.l.b16 %v1931
        %v2083 = vunpack.c.l.b16 %v1932
        %v2084 = vunpack.c.l.b16 %v1933
        %v2085 = vunpack.c.l.b16 %v1934
        %v2086 = vunpack.c.l.b16 %v1935
        %v2087 = vunpack.c.l.b16 %v1936
        %v2088 = vunpack.c.l.b16 %v1937
        %v2089 = vunpack.c.l.b16 %v1938
        %v2090 = vunpack.c.l.b16 %v1939
        %v2091 = vunpack.c.l.b16 %v1940
        %v2092 = vunpack.c.l.b16 %v1941
        %v2093 = vunpack.c.l.b16 %v1942
        %v2094 = vunpack.c.l.b16 %v1943
        %v2095 = vunpack.c.l.b16 %v1944
        %v2096 = vunpack.c.l.b16 %v1945
        %v2097 = vunpack.c.l.b16 %v1946
        %v2098 = vunpack.c.l.b16 %v1947
        %v2099 = vunpack.c.l.b16 %v1948
        %v2100 = vunpack.c.l.b16 %v1949
        %v2101 = vunpack.c.l.b16 %v1950
        %v2102 = vunpack.c.l.b16 %v1951
        %v2103 = vunpack.c.l.b16 %v1952
        %v2104 = vunpack.c.l.b16 %v1953
        %v2105 = vunpack.c.l.b16 %v1954
        %v2106 = vunpack.c.l.b16 %v1955
        %v2107 = vunpack.c.l.b16 %v1956
        %v2108 = vunpack.c.l.b16 %v1957
        %v2109 = vunpack.c.l.b16 %v1958
        %v2110 = vunpack.c.l.b16 %v1959
        %v2111 = vunpack.c.l.b16 %v1960
        %v2112 = vunpack.c.l.b16 %v1961
        %v2113 = vunpack.c.l.b16 %v1962
        %v2114 = vunpack.c.l.b16 %v1963
        %v2115 = vunpack.c.l.b16 %v1964
        %v2116 = vunpack.c.l.b16 %v1965
        %v2117 = vunpack.c.l.b16 %v1966
        %v2118 = vunpack.c.l.b16 %v1967
        %v2119 = vunpack.c.l.b16 %v1968
        %v2120 = vunpack.c.l.b16 %v1969
        %v2121 = vpack.c.b16 %v2050, %v2049
        %v2122 = vpack.c.b16 %v2052, %v2051
        %v2123 = vpack.c.b16 %v2054, %v2053
        %v2124 = vpack.c.b16 %v2056, %v2055
        %v2125 = vpack.c.b16 %v2058, %v2057
        %v2126 = vpack.c.b16 %v2060, %v2059
        %v2127 = vpack.c.b16 %v2062, %v2061
        %v2128 = vpack.c.b16 %v2064, %v2063
        %v2129 = vpack.c.b16 %v2066, %v2065
        %v2130 = vpack.c.b16 %v2068, %v2067
        %v2131 = vpack.c.b16 %v2070, %v2069
        %v2132 = vpack.c.b16 %v2072, %v2071
        %v2133 = vpack.c.b16 %v2074, %v2073
        %v2134 = vpack.c.b16 %v2076, %v2075
        %v2135 = vpack.c.b16 %v2078, %v2077
        %v2136 = vpack.c.b16 %v2080, %v2079
        %v2137 = vpack.c.b16 %v2082, %v2081
        %v2138 = vpack.c.b16 %v2084, %v2083
        %v2139 = vpack.c.b16 %v2086, %v2085
        %v2140 = vpack.c.b16 %v2088, %v2087
        %v2141 = vpack.c.b16 %v2090, %v2089
        %v2142 = vpack.c.b16 %v2092, %v2091
        %v2143 = vpack.c.b16 %v2094, %v2093
        %v2144 = vpack.c.b16 %v2096, %v2095
        %v2145 = vpack.c.b16 %v2098, %v2097
        %v2146 = vpack.c.b16 %v2100, %v2099
        %v2147 = vpack.c.b16 %v2102, %v2101
        %v2148 = vpack.c.b16 %v2104, %v2103
        %v2149 = vpack.c.b16 %v2106, %v2105
        %v2150 = vpack.c.b16 %v2108, %v2107
        %v2151 = vpack.c.b16 %v2110, %v2109
        %v2152 = vpack.c.b16 %v2112, %v2111
        %v2153 = vpack.c.b16 %v2114, %v2113
        %v2154 = vpack.c.b16 %v2116, %v2115
        %v2155 = vpack.c.b16 %v2118, %v2117
        %v2156 = vpack.c.b16 %v2120, %v2119
        %v2194 = vsel %vm342, %v1837, 0
        %v2197 = vsel %vm342, %v1842, 0
        %v2200 = vsel %vm342, %v1846, 0
        %v2203 = vsel %vm342, %v1850, 0
        %v2206 = vsel %vm342, %v1854, 0
        %v2209 = vsel %vm342, %v1858, 0
        %v2212 = vsel %vm342, %v1862, 0
        %v2215 = vsel %vm342, %v1866, 0
        %v2218 = vsel %vm342, %v1870, 0
        %v2221 = vsel %vm342, %v1874, 0
        %v2224 = vsel %vm342, %v1878, 0
        %v2227 = vsel %vm342, %v1882, 0
        %v2230 = vsel %vm342, %v1886, 0
        %v2233 = vsel %vm342, %v1890, 0
        %v2236 = vsel %vm342, %v1894, 0
        %v2239 = vsel %vm342, %v1897, 0
        %2241 = vmatprep.subr.bf16.mxu0 0
        %2242 = vmatpush1.bf16.msra.mxu0 %v2128
        %2243 = vmatprep.subr.bf16.mxu0 0
        %2244 = vmatpush1.bf16.msra.mxu0 %v2127
        %2245 = vmatprep.subr.bf16.mxu0 0
        %2246 = vmatpush1.bf16.msra.mxu0 %v2126
        %2247 = vmatprep.subr.bf16.mxu0 0
        %2248 = vmatpush1.bf16.msra.mxu0 %v2125
        %2249 = vmatprep.subr.bf16.mxu0 0
        %2250 = vmatpush1.bf16.msra.mxu0 %v2124
        %2251 = vmatprep.subr.bf16.mxu0 0
        %2252 = vmatpush1.bf16.msra.mxu0 %v2123
        %2253 = vmatprep.subr.bf16.mxu0 0
        %2254 = vmatpush1.bf16.msra.mxu0 %v2122
        %2255 = vmatprep.subr.bf16.mxu0 0
        %2256 = vmatpush1.bf16.msra.mxu0 %v2121
        %2257 = vmatprep.subr.bf16.mxu0 0
        %2258 = vmatpush2.bf16.msra.mxu0 %v2136
        %2259 = vmatprep.subr.bf16.mxu0 0
        %2260 = vmatpush2.bf16.msra.mxu0 %v2135
        %2261 = vmatprep.subr.bf16.mxu0 0
        %2262 = vmatpush2.bf16.msra.mxu0 %v2134
        %2263 = vmatprep.subr.bf16.mxu0 0
        %2264 = vmatpush2.bf16.msra.mxu0 %v2133
        %2265 = vmatprep.subr.bf16.mxu0 0
        %2266 = vmatpush2.bf16.msra.mxu0 %v2132
        %2267 = vmatprep.subr.bf16.mxu0 0
        %2268 = vmatpush2.bf16.msra.mxu0 %v2131
        %2269 = vmatprep.subr.bf16.mxu0 0
        %2270 = vmatpush2.bf16.msra.mxu0 %v2130
        %2271 = vmatprep.subr.bf16.mxu0 0
        %2272 = vmatpush2.bf16.msra.mxu0 %v2129
        %2273 = vmatprep.mubr.bf16.mxu0 %v1834
        %2274 = vmatmul.mubr.bf16.gmra.mxu0 %v1833
        %v2275 = vpop.f32.mrf.mxu0
        %v2276 = vadd.f32 %v1975, %v2275
        %v2277 = vpop.f32.mrf.mxu0
        %v2278 = vpop.f32.mrf.mxu0
        %v2279 = vadd.f32 %v1975, %v2278
        %v2280 = vpop.f32.mrf.mxu0
        %2281 = vmatprep.mubr.bf16.mxu0 %v1839
        %2282 = vmatmul.mubr.bf16.gmra.mxu0 %v1838
        %v2283 = vpop.f32.mrf.mxu0
        %v2284 = vadd.f32 %v1975, %v2283
        %v2285 = vpop.f32.mrf.mxu0
        %v2286 = vpop.f32.mrf.mxu0
        %v2287 = vadd.f32 %v1975, %v2286
        %v2288 = vpop.f32.mrf.mxu0
        %2289 = vmatprep.mubr.bf16.mxu0 %v1843
        %2290 = vmatmul.mubr.bf16.gmra.mxu0 %v1836
        %v2291 = vpop.f32.mrf.mxu0
        %v2292 = vadd.f32 %v1975, %v2291
        %v2293 = vpop.f32.mrf.mxu0
        %v2294 = vpop.f32.mrf.mxu0
        %v2295 = vadd.f32 %v1975, %v2294
        %v2296 = vpop.f32.mrf.mxu0
        %2297 = vmatprep.mubr.bf16.mxu0 %v1847
        %2298 = vmatmul.mubr.bf16.gmra.mxu0 %v1841
        %v2299 = vpop.f32.mrf.mxu0
        %v2300 = vadd.f32 %v1975, %v2299
        %v2301 = vpop.f32.mrf.mxu0
        %v2302 = vpop.f32.mrf.mxu0
        %v2303 = vadd.f32 %v1975, %v2302
        %v2304 = vpop.f32.mrf.mxu0
        %2305 = vmatprep.mubr.bf16.mxu0 %v1851
        %2306 = vmatmul.mubr.bf16.gmra.mxu0 %v1845
        %v2307 = vpop.f32.mrf.mxu0
        %v2308 = vadd.f32 %v1975, %v2307
        %v2309 = vpop.f32.mrf.mxu0
        %v2310 = vpop.f32.mrf.mxu0
        %v2311 = vadd.f32 %v1975, %v2310
        %v2312 = vpop.f32.mrf.mxu0
        %2313 = vmatprep.mubr.bf16.mxu0 %v1855
        %2314 = vmatmul.mubr.bf16.gmra.mxu0 %v1849
        %v2315 = vpop.f32.mrf.mxu0
        %v2316 = vadd.f32 %v1975, %v2315
        %v2317 = vpop.f32.mrf.mxu0
        %v2318 = vpop.f32.mrf.mxu0
        %v2319 = vadd.f32 %v1975, %v2318
        %v2320 = vpop.f32.mrf.mxu0
        %2321 = vmatprep.mubr.bf16.mxu0 %v1859
        %2322 = vmatmul.mubr.bf16.gmra.mxu0 %v1853
        %v2323 = vpop.f32.mrf.mxu0
        %v2324 = vadd.f32 %v1975, %v2323
        %v2325 = vpop.f32.mrf.mxu0
        %v2326 = vpop.f32.mrf.mxu0
        %v2327 = vadd.f32 %v1975, %v2326
        %v2328 = vpop.f32.mrf.mxu0
        %2329 = vmatprep.mubr.bf16.mxu0 %v1863
        %2330 = vmatmul.mubr.bf16.gmra.mxu0 %v1857
        %v2331 = vpop.f32.mrf.mxu0
        %v2332 = vadd.f32 %v1975, %v2331
        %v2333 = vpop.f32.mrf.mxu0
        %v2334 = vpop.f32.mrf.mxu0
        %v2335 = vadd.f32 %v1975, %v2334
        %v2336 = vpop.f32.mrf.mxu0
        %2337 = vmatprep.mubr.bf16.mxu0 %v1867
        %2338 = vmatmul.mubr.bf16.gmra.mxu0 %v1861
        %v2339 = vpop.f32.mrf.mxu0
        %v2340 = vadd.f32 %v1975, %v2339
        %v2341 = vpop.f32.mrf.mxu0
        %v2342 = vpop.f32.mrf.mxu0
        %v2343 = vadd.f32 %v1975, %v2342
        %v2344 = vpop.f32.mrf.mxu0
        %2345 = vmatprep.mubr.bf16.mxu0 %v1871
        %2346 = vmatmul.mubr.bf16.gmra.mxu0 %v1865
        %v2347 = vpop.f32.mrf.mxu0
        %v2348 = vadd.f32 %v1975, %v2347
        %v2349 = vpop.f32.mrf.mxu0
        %v2350 = vpop.f32.mrf.mxu0
        %v2351 = vadd.f32 %v1975, %v2350
        %v2352 = vpop.f32.mrf.mxu0
        %2353 = vmatprep.mubr.bf16.mxu0 %v1875
        %2354 = vmatmul.mubr.bf16.gmra.mxu0 %v1869
        %v2355 = vpop.f32.mrf.mxu0
        %v2356 = vadd.f32 %v1975, %v2355
        %v2357 = vpop.f32.mrf.mxu0
        %v2358 = vpop.f32.mrf.mxu0
        %v2359 = vadd.f32 %v1975, %v2358
        %v2360 = vpop.f32.mrf.mxu0
        %2361 = vmatprep.mubr.bf16.mxu0 %v1879
        %2362 = vmatmul.mubr.bf16.gmra.mxu0 %v1873
        %v2363 = vpop.f32.mrf.mxu0
        %v2364 = vadd.f32 %v1975, %v2363
        %v2365 = vpop.f32.mrf.mxu0
        %v2366 = vpop.f32.mrf.mxu0
        %v2367 = vadd.f32 %v1975, %v2366
        %v2368 = vpop.f32.mrf.mxu0
        %2369 = vmatprep.mubr.bf16.mxu0 %v1883
        %2370 = vmatmul.mubr.bf16.gmra.mxu0 %v1877
        %v2371 = vpop.f32.mrf.mxu0
        %v2372 = vadd.f32 %v1975, %v2371
        %v2373 = vpop.f32.mrf.mxu0
        %v2374 = vpop.f32.mrf.mxu0
        %v2375 = vadd.f32 %v1975, %v2374
        %v2376 = vpop.f32.mrf.mxu0
        %2377 = vmatprep.mubr.bf16.mxu0 %v1887
        %2378 = vmatmul.mubr.bf16.gmra.mxu0 %v1881
        %v2379 = vpop.f32.mrf.mxu0
        %v2380 = vadd.f32 %v1975, %v2379
        %v2381 = vpop.f32.mrf.mxu0
        %v2382 = vpop.f32.mrf.mxu0
        %v2383 = vadd.f32 %v1975, %v2382
        %v2384 = vpop.f32.mrf.mxu0
        %2385 = vmatprep.mubr.bf16.mxu0 %v1891
        %2386 = vmatmul.mubr.bf16.gmra.mxu0 %v1885
        %v2387 = vpop.f32.mrf.mxu0
        %v2388 = vadd.f32 %v1975, %v2387
        %v2389 = vpop.f32.mrf.mxu0
        %v2390 = vpop.f32.mrf.mxu0
        %v2391 = vadd.f32 %v1975, %v2390
        %v2392 = vpop.f32.mrf.mxu0
        %2393 = vmatprep.mubr.bf16.mxu0 %v1895
        %2394 = vmatmul.mubr.bf16.gmra.mxu0 %v1889
        %v2395 = vpop.f32.mrf.mxu0
        %v2396 = vadd.f32 %v1975, %v2395
        %v2397 = vpop.f32.mrf.mxu0
        %v2398 = vpop.f32.mrf.mxu0
        %v2399 = vadd.f32 %v1975, %v2398
        %v2400 = vpop.f32.mrf.mxu0
        %2401 = vdwg.mxu0
        %2402 = vmatprep.subr.bf16.mxu0 0
        %2403 = vmatpush1.bf16.msra.mxu0 %v2144
        %2404 = vmatprep.subr.bf16.mxu0 0
        %2405 = vmatpush1.bf16.msra.mxu0 %v2143
        %2406 = vmatprep.subr.bf16.mxu0 0
        %2407 = vmatpush1.bf16.msra.mxu0 %v2142
        %2408 = vmatprep.subr.bf16.mxu0 0
        %2409 = vmatpush1.bf16.msra.mxu0 %v2141
        %2410 = vmatprep.subr.bf16.mxu0 0
        %2411 = vmatpush1.bf16.msra.mxu0 %v2140
        %2412 = vmatprep.subr.bf16.mxu0 0
        %2413 = vmatpush1.bf16.msra.mxu0 %v2139
        %2414 = vmatprep.subr.bf16.mxu0 0
        %2415 = vmatpush1.bf16.msra.mxu0 %v2138
        %2416 = vmatprep.subr.bf16.mxu0 0
        %2417 = vmatpush1.bf16.msra.mxu0 %v2137
        %2418 = vmatprep.subr.bf16.mxu0 0
        %2419 = vmatpush2.bf16.msra.mxu0 %v2152
        %2420 = vmatprep.subr.bf16.mxu0 0
        %2421 = vmatpush2.bf16.msra.mxu0 %v2151
        %2422 = vmatprep.subr.bf16.mxu0 0
        %2423 = vmatpush2.bf16.msra.mxu0 %v2150
        %2424 = vmatprep.subr.bf16.mxu0 0
        %2425 = vmatpush2.bf16.msra.mxu0 %v2149
        %2426 = vmatprep.subr.bf16.mxu0 0
        %2427 = vmatpush2.bf16.msra.mxu0 %v2148
        %2428 = vmatprep.subr.bf16.mxu0 0
        %2429 = vmatpush2.bf16.msra.mxu0 %v2147
        %2430 = vmatprep.subr.bf16.mxu0 0
        %2431 = vmatpush2.bf16.msra.mxu0 %v2146
        %2432 = vmatprep.subr.bf16.mxu0 0
        %2433 = vmatpush2.bf16.msra.mxu0 %v2145
        %2434 = vmatprep.mubr.bf16.mxu0 %v1836
        %2435 = vmatmul.mubr.bf16.gmra.mxu0 %v1835
        %v2436 = vpop.f32.mrf.mxu0
        %v2437 = vadd.f32 %v2276, %v2436
        %v2438 = vpop.f32.mrf.mxu0
        %v2439 = vpop.f32.mrf.mxu0
        %v2440 = vadd.f32 %v2279, %v2439
        %v2441 = vpop.f32.mrf.mxu0
        %2442 = vmatprep.mubr.bf16.mxu0 %v1841
        %2443 = vmatmul.mubr.bf16.gmra.mxu0 %v1840
        %v2444 = vpop.f32.mrf.mxu0
        %v2445 = vadd.f32 %v2284, %v2444
        %v2446 = vpop.f32.mrf.mxu0
        %v2447 = vpop.f32.mrf.mxu0
        %v2448 = vadd.f32 %v2287, %v2447
        %v2449 = vpop.f32.mrf.mxu0
        %2450 = vmatprep.mubr.bf16.mxu0 %v1845
        %2451 = vmatmul.mubr.bf16.gmra.mxu0 %v1844
        %v2452 = vpop.f32.mrf.mxu0
        %v2453 = vadd.f32 %v2292, %v2452
        %v2454 = vpop.f32.mrf.mxu0
        %v2455 = vpop.f32.mrf.mxu0
        %v2456 = vadd.f32 %v2295, %v2455
        %v2457 = vpop.f32.mrf.mxu0
        %2458 = vmatprep.mubr.bf16.mxu0 %v1849
        %2459 = vmatmul.mubr.bf16.gmra.mxu0 %v1848
        %v2460 = vpop.f32.mrf.mxu0
        %v2461 = vadd.f32 %v2300, %v2460
        %v2462 = vpop.f32.mrf.mxu0
        %v2463 = vpop.f32.mrf.mxu0
        %v2464 = vadd.f32 %v2303, %v2463
        %v2465 = vpop.f32.mrf.mxu0
        %2466 = vmatprep.mubr.bf16.mxu0 %v1853
        %2467 = vmatmul.mubr.bf16.gmra.mxu0 %v1852
        %v2468 = vpop.f32.mrf.mxu0
        %v2469 = vadd.f32 %v2308, %v2468
        %v2470 = vpop.f32.mrf.mxu0
        %v2471 = vpop.f32.mrf.mxu0
        %v2472 = vadd.f32 %v2311, %v2471
        %v2473 = vpop.f32.mrf.mxu0
        %2474 = vmatprep.mubr.bf16.mxu0 %v1857
        %2475 = vmatmul.mubr.bf16.gmra.mxu0 %v1856
        %v2476 = vpop.f32.mrf.mxu0
        %v2477 = vadd.f32 %v2316, %v2476
        %v2478 = vpop.f32.mrf.mxu0
        %v2479 = vpop.f32.mrf.mxu0
        %v2480 = vadd.f32 %v2319, %v2479
        %v2481 = vpop.f32.mrf.mxu0
        %2482 = vmatprep.mubr.bf16.mxu0 %v1861
        %2483 = vmatmul.mubr.bf16.gmra.mxu0 %v1860
        %v2484 = vpop.f32.mrf.mxu0
        %v2485 = vadd.f32 %v2324, %v2484
        %v2486 = vpop.f32.mrf.mxu0
        %v2487 = vpop.f32.mrf.mxu0
        %v2488 = vadd.f32 %v2327, %v2487
        %v2489 = vpop.f32.mrf.mxu0
        %2490 = vmatprep.mubr.bf16.mxu0 %v1865
        %2491 = vmatmul.mubr.bf16.gmra.mxu0 %v1864
        %v2492 = vpop.f32.mrf.mxu0
        %v2493 = vadd.f32 %v2332, %v2492
        %v2494 = vpop.f32.mrf.mxu0
        %v2495 = vpop.f32.mrf.mxu0
        %v2496 = vadd.f32 %v2335, %v2495
        %v2497 = vpop.f32.mrf.mxu0
        %2498 = vmatprep.mubr.bf16.mxu0 %v1869
        %2499 = vmatmul.mubr.bf16.gmra.mxu0 %v1868
        %v2500 = vpop.f32.mrf.mxu0
        %v2501 = vadd.f32 %v2340, %v2500
        %v2502 = vpop.f32.mrf.mxu0
        %v2503 = vpop.f32.mrf.mxu0
        %v2504 = vadd.f32 %v2343, %v2503
        %v2505 = vpop.f32.mrf.mxu0
        %2506 = vmatprep.mubr.bf16.mxu0 %v1873
        %2507 = vmatmul.mubr.bf16.gmra.mxu0 %v1872
        %v2508 = vpop.f32.mrf.mxu0
        %v2509 = vadd.f32 %v2348, %v2508
        %v2510 = vpop.f32.mrf.mxu0
        %v2511 = vpop.f32.mrf.mxu0
        %v2512 = vadd.f32 %v2351, %v2511
        %v2513 = vpop.f32.mrf.mxu0
        %2514 = vmatprep.mubr.bf16.mxu0 %v1877
        %2515 = vmatmul.mubr.bf16.gmra.mxu0 %v1876
        %v2516 = vpop.f32.mrf.mxu0
        %v2517 = vadd.f32 %v2356, %v2516
        %v2518 = vpop.f32.mrf.mxu0
        %v2519 = vpop.f32.mrf.mxu0
        %v2520 = vadd.f32 %v2359, %v2519
        %v2521 = vpop.f32.mrf.mxu0
        %2522 = vmatprep.mubr.bf16.mxu0 %v1881
        %2523 = vmatmul.mubr.bf16.gmra.mxu0 %v1880
        %v2524 = vpop.f32.mrf.mxu0
        %v2525 = vadd.f32 %v2364, %v2524
        %v2526 = vpop.f32.mrf.mxu0
        %v2527 = vpop.f32.mrf.mxu0
        %v2528 = vadd.f32 %v2367, %v2527
        %v2529 = vpop.f32.mrf.mxu0
        %2530 = vmatprep.mubr.bf16.mxu0 %v1885
        %2531 = vmatmul.mubr.bf16.gmra.mxu0 %v1884
        %v2532 = vpop.f32.mrf.mxu0
        %v2533 = vadd.f32 %v2372, %v2532
        %v2534 = vpop.f32.mrf.mxu0
        %v2535 = vpop.f32.mrf.mxu0
        %v2536 = vadd.f32 %v2375, %v2535
        %v2537 = vpop.f32.mrf.mxu0
        %2538 = vmatprep.mubr.bf16.mxu0 %v1889
        %2539 = vmatmul.mubr.bf16.gmra.mxu0 %v1888
        %v2540 = vpop.f32.mrf.mxu0
        %v2541 = vadd.f32 %v2380, %v2540
        %v2542 = vpop.f32.mrf.mxu0
        %v2543 = vpop.f32.mrf.mxu0
        %v2544 = vadd.f32 %v2383, %v2543
        %v2545 = vpop.f32.mrf.mxu0
        %2546 = vmatprep.mubr.bf16.mxu0 %v1893
        %2547 = vmatmul.mubr.bf16.gmra.mxu0 %v1892
        %v2548 = vpop.f32.mrf.mxu0
        %v2549 = vadd.f32 %v2388, %v2548
        %v2550 = vpop.f32.mrf.mxu0
        %v2551 = vpop.f32.mrf.mxu0
        %v2552 = vadd.f32 %v2391, %v2551
        %v2553 = vpop.f32.mrf.mxu0
        %2554 = vmatprep.mubr.bf16.mxu0 %v1833
        %2555 = vmatmul.mubr.bf16.gmra.mxu0 %v1896
        %v2556 = vpop.f32.mrf.mxu0
        %v2557 = vadd.f32 %v2396, %v2556
        %v2558 = vpop.f32.mrf.mxu0
        %v2559 = vpop.f32.mrf.mxu0
        %v2560 = vadd.f32 %v2399, %v2559
        %v2561 = vpop.f32.mrf.mxu0
        %2562 = vdwg.mxu0
        %2563 = vmatprep.subr.bf16.mxu0 0
        %2564 = vmatpush1.bf16.msra.mxu0 0
        %2565 = vmatprep.subr.bf16.mxu0 0
        %2566 = vmatpush1.bf16.msra.mxu0 0
        %2567 = vmatprep.subr.bf16.mxu0 0
        %2568 = vmatpush1.bf16.msra.mxu0 0
        %2569 = vmatprep.subr.bf16.mxu0 0
        %2570 = vmatpush1.bf16.msra.mxu0 0
        %2571 = vmatprep.subr.bf16.mxu0 0
        %2572 = vmatpush1.bf16.msra.mxu0 %v2156
        %2573 = vmatprep.subr.bf16.mxu0 0
        %2574 = vmatpush1.bf16.msra.mxu0 %v2155
        %2575 = vmatprep.subr.bf16.mxu0 0
        %2576 = vmatpush1.bf16.msra.mxu0 %v2154
        %2577 = vmatprep.subr.bf16.mxu0 0
        %2578 = vmatpush1.bf16.msra.mxu0 %v2153
        %2579 = vmatprep.subr.bf16.mxu0 0
        %2580 = vmatpush2.bf16.msra.mxu0 0
        %2581 = vmatprep.subr.bf16.mxu0 0
        %2582 = vmatpush2.bf16.msra.mxu0 0
        %2583 = vmatprep.subr.bf16.mxu0 0
        %2584 = vmatpush2.bf16.msra.mxu0 0
        %2585 = vmatprep.subr.bf16.mxu0 0
        %2586 = vmatpush2.bf16.msra.mxu0 0
        %2587 = vmatprep.subr.bf16.mxu0 0
        %2588 = vmatpush2.bf16.msra.mxu0 0
        %2589 = vmatprep.subr.bf16.mxu0 0
        %2590 = vmatpush2.bf16.msra.mxu0 0
        %2591 = vmatprep.subr.bf16.mxu0 0
        %2592 = vmatpush2.bf16.msra.mxu0 0
        %2593 = vmatprep.subr.bf16.mxu0 0
        %2594 = vmatpush2.bf16.msra.mxu0 0
        %2595 = vmatprep.mubr.bf16.mxu0 0
        %2596 = vmatmul.mubr.bf16.gmra.mxu0 %v2194
        %v2597 = vpop.f32.mrf.mxu0
        %v2598 = vadd.f32 %v2437, %v2597
        %v2599 = vpop.f32.mrf.mxu0
        %v2600 = vpop.f32.mrf.mxu0
        %v2601 = vadd.f32 %v2440, %v2600
        %v2602 = vpop.f32.mrf.mxu0
        %2603 = vmatprep.mubr.bf16.mxu0 0
        %2604 = vmatmul.mubr.bf16.gmra.mxu0 %v2197
        %v2605 = vpop.f32.mrf.mxu0
        %v2606 = vadd.f32 %v2445, %v2605
        %v2607 = vpop.f32.mrf.mxu0
        %v2608 = vpop.f32.mrf.mxu0
        %v2609 = vadd.f32 %v2448, %v2608
        %v2610 = vpop.f32.mrf.mxu0
        %2611 = vmatprep.mubr.bf16.mxu0 0
        %2612 = vmatmul.mubr.bf16.gmra.mxu0 %v2200
        %v2613 = vpop.f32.mrf.mxu0
        %v2614 = vadd.f32 %v2453, %v2613
        %v2615 = vpop.f32.mrf.mxu0
        %v2616 = vpop.f32.mrf.mxu0
        %v2617 = vadd.f32 %v2456, %v2616
        %v2618 = vpop.f32.mrf.mxu0
        %2619 = vmatprep.mubr.bf16.mxu0 0
        %2620 = vmatmul.mubr.bf16.gmra.mxu0 %v2203
        %v2621 = vpop.f32.mrf.mxu0
        %v2622 = vadd.f32 %v2461, %v2621
        %v2623 = vpop.f32.mrf.mxu0
        %v2624 = vpop.f32.mrf.mxu0
        %v2625 = vadd.f32 %v2464, %v2624
        %v2626 = vpop.f32.mrf.mxu0
        %2627 = vmatprep.mubr.bf16.mxu0 0
        %2628 = vmatmul.mubr.bf16.gmra.mxu0 %v2206
        %v2629 = vpop.f32.mrf.mxu0
        %v2630 = vadd.f32 %v2469, %v2629
        %v2631 = vpop.f32.mrf.mxu0
        %v2632 = vpop.f32.mrf.mxu0
        %v2633 = vadd.f32 %v2472, %v2632
        %v2634 = vpop.f32.mrf.mxu0
        %2635 = vmatprep.mubr.bf16.mxu0 0
        %2636 = vmatmul.mubr.bf16.gmra.mxu0 %v2209
        %v2637 = vpop.f32.mrf.mxu0
        %v2638 = vadd.f32 %v2477, %v2637
        %v2639 = vpop.f32.mrf.mxu0
        %v2640 = vpop.f32.mrf.mxu0
        %v2641 = vadd.f32 %v2480, %v2640
        %v2642 = vpop.f32.mrf.mxu0
        %2643 = vmatprep.mubr.bf16.mxu0 0
        %2644 = vmatmul.mubr.bf16.gmra.mxu0 %v2212
        %v2645 = vpop.f32.mrf.mxu0
        %v2646 = vadd.f32 %v2485, %v2645
        %v2647 = vpop.f32.mrf.mxu0
        %v2648 = vpop.f32.mrf.mxu0
        %v2649 = vadd.f32 %v2488, %v2648
        %v2650 = vpop.f32.mrf.mxu0
        %2651 = vmatprep.mubr.bf16.mxu0 0
        %2652 = vmatmul.mubr.bf16.gmra.mxu0 %v2215
        %v2653 = vpop.f32.mrf.mxu0
        %v2654 = vadd.f32 %v2493, %v2653
        %v2655 = vpop.f32.mrf.mxu0
        %v2656 = vpop.f32.mrf.mxu0
        %v2657 = vadd.f32 %v2496, %v2656
        %v2658 = vpop.f32.mrf.mxu0
        %2659 = vmatprep.mubr.bf16.mxu0 0
        %2660 = vmatmul.mubr.bf16.gmra.mxu0 %v2218
        %v2661 = vpop.f32.mrf.mxu0
        %v2662 = vadd.f32 %v2501, %v2661
        %v2663 = vpop.f32.mrf.mxu0
        %v2664 = vpop.f32.mrf.mxu0
        %v2665 = vadd.f32 %v2504, %v2664
        %v2666 = vpop.f32.mrf.mxu0
        %2667 = vmatprep.mubr.bf16.mxu0 0
        %2668 = vmatmul.mubr.bf16.gmra.mxu0 %v2221
        %v2669 = vpop.f32.mrf.mxu0
        %v2670 = vadd.f32 %v2509, %v2669
        %v2671 = vpop.f32.mrf.mxu0
        %v2672 = vpop.f32.mrf.mxu0
        %v2673 = vadd.f32 %v2512, %v2672
        %v2674 = vpop.f32.mrf.mxu0
        %2675 = vmatprep.mubr.bf16.mxu0 0
        %2676 = vmatmul.mubr.bf16.gmra.mxu0 %v2224
        %v2677 = vpop.f32.mrf.mxu0
        %v2678 = vadd.f32 %v2517, %v2677
        %v2679 = vpop.f32.mrf.mxu0
        %v2680 = vpop.f32.mrf.mxu0
        %v2681 = vadd.f32 %v2520, %v2680
        %v2682 = vpop.f32.mrf.mxu0
        %2683 = vmatprep.mubr.bf16.mxu0 0
        %2684 = vmatmul.mubr.bf16.gmra.mxu0 %v2227
        %v2685 = vpop.f32.mrf.mxu0
        %v2686 = vadd.f32 %v2525, %v2685
        %v2687 = vpop.f32.mrf.mxu0
        %v2688 = vpop.f32.mrf.mxu0
        %v2689 = vadd.f32 %v2528, %v2688
        %v2690 = vpop.f32.mrf.mxu0
        %2691 = vmatprep.mubr.bf16.mxu0 0
        %2692 = vmatmul.mubr.bf16.gmra.mxu0 %v2230
        %v2693 = vpop.f32.mrf.mxu0
        %v2694 = vadd.f32 %v2533, %v2693
        %v2695 = vpop.f32.mrf.mxu0
        %v2696 = vpop.f32.mrf.mxu0
        %v2697 = vadd.f32 %v2536, %v2696
        %v2698 = vpop.f32.mrf.mxu0
        %2699 = vmatprep.mubr.bf16.mxu0 0
        %2700 = vmatmul.mubr.bf16.gmra.mxu0 %v2233
        %v2701 = vpop.f32.mrf.mxu0
        %v2702 = vadd.f32 %v2541, %v2701
        %v2703 = vpop.f32.mrf.mxu0
        %v2704 = vpop.f32.mrf.mxu0
        %v2705 = vadd.f32 %v2544, %v2704
        %v2706 = vpop.f32.mrf.mxu0
        %2707 = vmatprep.mubr.bf16.mxu0 0
        %2708 = vmatmul.mubr.bf16.gmra.mxu0 %v2236
        %v2709 = vpop.f32.mrf.mxu0
        %v2710 = vadd.f32 %v2549, %v2709
        %v2711 = vpop.f32.mrf.mxu0
        %v2712 = vpop.f32.mrf.mxu0
        %v2713 = vadd.f32 %v2552, %v2712
        %v2714 = vpop.f32.mrf.mxu0
        %2715 = vmatprep.mubr.bf16.mxu0 0
        %2716 = vmatmul.mubr.bf16.gmra.mxu0 %v2239
        %v2717 = vpop.f32.mrf.mxu0
        %v2718 = vadd.f32 %v2557, %v2717
        %v2719 = vpop.f32.mrf.mxu0
        %v2720 = vpop.f32.mrf.mxu0
        %v2721 = vadd.f32 %v2560, %v2720
        %v2722 = vpop.f32.mrf.mxu0
        %2723 = vdwg.mxu0
        %v2724 = vpack.c.bf16 %v2601, %v2598
        %v2725 = vpack.c.bf16 %v2609, %v2606
        %v2726 = vpack.c.bf16 %v2617, %v2614
        %v2727 = vpack.c.bf16 %v2625, %v2622
        %v2728 = vpack.c.bf16 %v2633, %v2630
        %v2729 = vpack.c.bf16 %v2641, %v2638
        %v2730 = vpack.c.bf16 %v2649, %v2646
        %v2731 = vpack.c.bf16 %v2657, %v2654
        %v2732 = vpack.c.bf16 %v2665, %v2662
        %v2733 = vpack.c.bf16 %v2673, %v2670
        %v2734 = vpack.c.bf16 %v2681, %v2678
        %v2735 = vpack.c.bf16 %v2689, %v2686
        %v2736 = vpack.c.bf16 %v2697, %v2694
        %v2737 = vpack.c.bf16 %v2705, %v2702
        %v2738 = vpack.c.bf16 %v2713, %v2710
        %v2739 = vpack.c.bf16 %v2721, %v2718
        %v2756 = vunpack.c.l.b16 %v2724
        %v2757 = vunpack.c.h.b16 %v2724
        %v2758 = vunpack.c.l.b16 %v2725
        %v2759 = vunpack.c.h.b16 %v2725
        %v2760 = vunpack.c.l.b16 %v2726
        %v2761 = vunpack.c.h.b16 %v2726
        %v2762 = vunpack.c.l.b16 %v2727
        %v2763 = vunpack.c.h.b16 %v2727
        %v2764 = vunpack.c.l.b16 %v2728
        %v2765 = vunpack.c.h.b16 %v2728
        %v2766 = vunpack.c.l.b16 %v2729
        %v2767 = vunpack.c.h.b16 %v2729
        %v2768 = vunpack.c.l.b16 %v2730
        %v2769 = vunpack.c.h.b16 %v2730
        %v2770 = vunpack.c.l.b16 %v2731
        %v2771 = vunpack.c.h.b16 %v2731
        %v2772 = vunpack.c.l.b16 %v2732
        %v2773 = vunpack.c.h.b16 %v2732
        %v2774 = vunpack.c.l.b16 %v2733
        %v2775 = vunpack.c.h.b16 %v2733
        %v2776 = vunpack.c.l.b16 %v2734
        %v2777 = vunpack.c.h.b16 %v2734
        %v2778 = vunpack.c.l.b16 %v2735
        %v2779 = vunpack.c.h.b16 %v2735
        %v2780 = vunpack.c.l.b16 %v2736
        %v2781 = vunpack.c.h.b16 %v2736
        %v2782 = vunpack.c.l.b16 %v2737
        %v2783 = vunpack.c.h.b16 %v2737
        %v2784 = vunpack.c.l.b16 %v2738
        %v2785 = vunpack.c.h.b16 %v2738
        %v2786 = vunpack.c.l.b16 %v2739
        %v2787 = vunpack.c.h.b16 %v2739
        %v2788 = vpack.c.b16 %v2756, %v2756
        %v2789 = vpack.c.b16 %v2757, %v2757
        %v2790 = vpack.c.b16 %v2758, %v2758
        %v2791 = vpack.c.b16 %v2759, %v2759
        %v2792 = vpack.c.b16 %v2760, %v2760
        %v2793 = vpack.c.b16 %v2761, %v2761
        %v2794 = vpack.c.b16 %v2762, %v2762
        %v2795 = vpack.c.b16 %v2763, %v2763
        %v2796 = vpack.c.b16 %v2764, %v2764
        %v2797 = vpack.c.b16 %v2765, %v2765
        %v2798 = vpack.c.b16 %v2766, %v2766
        %v2799 = vpack.c.b16 %v2767, %v2767
        %v2800 = vpack.c.b16 %v2768, %v2768
        %v2801 = vpack.c.b16 %v2769, %v2769
        %v2802 = vpack.c.b16 %v2770, %v2770
        %v2803 = vpack.c.b16 %v2771, %v2771
        %v2804 = vpack.c.b16 %v2772, %v2772
        %v2805 = vpack.c.b16 %v2773, %v2773
        %v2806 = vpack.c.b16 %v2774, %v2774
        %v2807 = vpack.c.b16 %v2775, %v2775
        %v2808 = vpack.c.b16 %v2776, %v2776
        %v2809 = vpack.c.b16 %v2777, %v2777
        %v2810 = vpack.c.b16 %v2778, %v2778
        %v2811 = vpack.c.b16 %v2779, %v2779
        %v2812 = vpack.c.b16 %v2780, %v2780
        %v2813 = vpack.c.b16 %v2781, %v2781
        %v2814 = vpack.c.b16 %v2782, %v2782
        %v2815 = vpack.c.b16 %v2783, %v2783
        %v2816 = vpack.c.b16 %v2784, %v2784
        %v2817 = vpack.c.b16 %v2785, %v2785
        %v2818 = vpack.c.b16 %v2786, %v2786
        %v2819 = vpack.c.b16 %v2787, %v2787
        %2852 = vst [vmem:[%s300] sm:$0xf] %v2788
        %2853 = vst [vmem:[%s300 + $0x4] sm:$0xf] %v2789
        %2854 = vst [vmem:[%s300 + $0x8] sm:$0xf] %v2790
        %2855 = vst [vmem:[%s300 + $0xc] sm:$0xf] %v2791
        %2856 = vst [vmem:[%s300 + $0x10] sm:$0xf] %v2792
        %2857 = vst [vmem:[%s300 + $0x14] sm:$0xf] %v2793
        %2858 = vst [vmem:[%s300 + $0x18] sm:$0xf] %v2794
        %2859 = vst [vmem:[%s300 + $0x1c] sm:$0xf] %v2795
        %2860 = vst [vmem:[%s300 + $0x20] sm:$0xf] %v2796
        %2861 = vst [vmem:[%s300 + $0x24] sm:$0xf] %v2797
        %2862 = vst [vmem:[%s300 + $0x28] sm:$0xf] %v2798
        %2863 = vst [vmem:[%s300 + $0x2c] sm:$0xf] %v2799
        %2864 = vst [vmem:[%s300 + $0x30] sm:$0xf] %v2800
        %2865 = vst [vmem:[%s300 + $0x34] sm:$0xf] %v2801
        %2866 = vst [vmem:[%s300 + $0x38] sm:$0xf] %v2802
        %2867 = vst [vmem:[%s300 + $0x3c] sm:$0xf] %v2803
        %2868 = vst [vmem:[%s300 + $0x40] sm:$0xf] %v2804
        %2869 = vst [vmem:[%s300 + $0x44] sm:$0xf] %v2805
        %2870 = vst [vmem:[%s300 + $0x48] sm:$0xf] %v2806
        %2871 = vst [vmem:[%s300 + $0x4c] sm:$0xf] %v2807
        %2872 = vst [vmem:[%s300 + $0x50] sm:$0xf] %v2808
        %2873 = vst [vmem:[%s300 + $0x54] sm:$0xf] %v2809
        %2874 = vst [vmem:[%s300 + $0x58] sm:$0xf] %v2810
        %2875 = vst [vmem:[%s300 + $0x5c] sm:$0xf] %v2811
        %2876 = vst [vmem:[%s300 + $0x60] sm:$0xf] %v2812
        %2877 = vst [vmem:[%s300 + $0x64] sm:$0xf] %v2813
        %2878 = vst [vmem:[%s300 + $0x68] sm:$0xf] %v2814
        %2879 = vst [vmem:[%s300 + $0x6c] sm:$0xf] %v2815
        %2880 = vst [vmem:[%s300 + $0x70] sm:$0xf] %v2816
        %2881 = vst [vmem:[%s300 + $0x74] sm:$0xf] %v2817
        %2882 = vst [vmem:[%s300 + $0x78] sm:$0xf] %v2818
        %2883 = vst [vmem:[%s300 + $0x7c] sm:$0xf] %v2819
        %p2884 = scmp.lt.s32.totalorder %s21, 1
        %s2885 = scalar_select %p2884, %s21, 1
        %s2886 = smul.addr %s2885, 32
        %s2887 = smul.addr %s2886, 4
        %s2888 = scalar_lea.vmem %s6, %s2887
        // Predicated region
        $region57: #{unet_output_layer_fwd.1} parent=43 // pred_check
          %p2889 = pneg %p170
        $region58: #{unet_output_layer_fwd.1} parent=43 // pred_check_branch
          %2891 = sbr.rel (%p2889) target = $region60
        $region59: #{unet_output_layer_fwd.1} parent=43 // pred_region
          _
        $region60: #{unet_output_layer_fwd.1} parent=43 // pred_fallthru
          _
      $region44: #{unet_output_layer_fwd.1} parent=5 // pred_fallthru
        _
      %p2892 = scmp.le.s32.totalorder 2, %s16
      // Predicated region
      $region61: #{unet_output_layer_fwd.1} parent=5 // pred_check
        %p2893 = pneg %p2892
      $region62: #{unet_output_layer_fwd.1} parent=5 // pred_check_branch
        %2895 = sbr.rel (%p2893) target = $region64
      $region63: #{unet_output_layer_fwd.1} parent=5 // pred_region
        %s2896 = ssub.s32 %s16, 2
        // Predicated region
        $region65: #{unet_output_layer_fwd.1} parent=63 // pred_check
          %p2897 = pneg %p176
        $region66: #{unet_output_layer_fwd.1} parent=63 // pred_check_branch
          %2899 = sbr.rel (%p2897) target = $region68
        $region67: #{unet_output_layer_fwd.1} parent=63 // pred_region
          %p2900 = scmp.lt.s32.totalorder %s22, 1
          %s2901 = scalar_select %p2900, %s22, 1
          %s2902 = smul.addr %s2901, 32
          %s2903 = smul.addr %s2902, 4
          %s2904 = scalar_lea.vmem %s6, %s2903
        $region68: #{unet_output_layer_fwd.1} parent=63 // pred_fallthru
          _
      $region64: #{unet_output_layer_fwd.1} parent=5 // pred_fallthru
        _
    $region6: #{unet_output_layer_fwd.1} parent=1 // loop_footer
      %s20 = sadd.s32 1, %s16
    $region7: #{unet_output_layer_fwd.1} parent=1 // loop_footer_branch
      %15 = sbr.rel target = $region3
    $region8: #{unet_output_layer_fwd.1} parent=1 // loop_exit
      _
    %2905 = vsyncpa [#allocation3], 1
    %s2906 = scalar_lea.sflag [#allocation3], 1
    %2907 = vsyncpa %s2906, 1
    %2908 = vsyncpa [#allocation5], 1

</llo_original>
